<compile_context>
chip_gen: v7x
topology: tpu7x:2x2x1
jax: 0.10.0
libtpu: 0.0.40
codegen_flags: <defaults>
</compile_context>

<pallas_src>
import functools

import numpy as np

import jax
import jax.numpy as jnp
from jax.experimental import pallas as pl
from jax.experimental.pallas import tpu as pltpu


# ---------------------------------------------------------------------------
# Pallas kernel: all T residual blocks + final relu(M - tau), fused.
# ---------------------------------------------------------------------------
def _mnet_kernel(x_ref, a1_ref, b1_ref, a2_ref, b2_ref, tau_ref, out_ref, *,
                 T, H):
    """Fused Mnet forward for one block of batch rows.

    x_ref  : (R, WC) f32        R = (#batch elems this step) * H, WC = W*C
    a*_ref : (T, 3*WC, WC) bf16 stacked [dh=0; dh=1; dh=2] block-banded conv
                                weights (dw taps + CxC mix + BN scale folded)
    b*_ref : (T, 1, WC) f32     folded conv-bias + BN bias (per channel, tiled)
    tau_ref: (1, WC) f32        per-channel tau, tiled over W
    out_ref: (R, WC) f32
    """
    f32 = jnp.float32
    R, WC = x_ref.shape
    nb = R // H                         # batch elements handled this grid step

    # Halo masks (hoisted, computed once): zero the rows where the circular
    # roll wraps across an image / batch-element boundary, reproducing the
    # conv's 'SAME' zero padding in the vertical direction.
    row = jax.lax.broadcasted_iota(jnp.int32, (R, WC), 0)
    is_first = functools.reduce(jnp.logical_or,
                                [row == n * H for n in range(nb)])
    is_last = functools.reduce(jnp.logical_or,
                               [row == n * H + (H - 1) for n in range(nb)])

    def conv3x3(x, a_ref, t):
        # roll(shift=+1)[r] = x[r-1] (row above); roll(shift=R-1)[r] = x[r+1].
        # Rolls run on the XLU slot, off the MXU critical path.
        x_dn = jnp.where(is_first, 0.0, pltpu.roll(x, shift=1, axis=0))
        x_up = jnp.where(is_last, 0.0, pltpu.roll(x, shift=R - 1, axis=0))
        # One MXU dot per conv: K = 3*WC fills the contraction depth, and the
        # bf16 operands hit the native fast path with f32 accumulation.
        lhs = jnp.concatenate([x_dn, x, x_up], axis=-1).astype(jnp.bfloat16)
        return jnp.dot(lhs, a_ref[t], preferred_element_type=f32)

    M = x_ref[...]
    # T is small & static -> unrolled.  (If T grows beyond a handful, switch to
    # lax.fori_loop(..., unroll=True) with dynamic a_ref[t] indexing.)
    for t in range(T):
        y = jnp.maximum(conv3x3(M, a1_ref, t) + b1_ref[t], 0.0)
        M = jnp.maximum(M + conv3x3(y, a2_ref, t) + b2_ref[t], 0.0)

    # Fused final step: M = relu(M - tau)
    out_ref[...] = jnp.maximum(M - tau_ref[...], 0.0)


# ---------------------------------------------------------------------------
# pallas_call wrapper
# ---------------------------------------------------------------------------
def mnet_rows(x_rows, p, *, H, rows_per_step=None):
    """x_rows: (N*H, W*C) f32 -> (N*H, W*C) f32."""
    NH, WC = x_rows.shape
    T = p["a1"].shape[0]
    if rows_per_step is None:
        # Single grid step (whole batch in one matmul stream): best on
        # single-TensorCore v5e/v6e.  On v7x with larger N, pass NH // 2 so
        # each TensorCore gets half the batch ("parallel" grid axis).
        rows_per_step = NH
    assert NH % rows_per_step == 0 and rows_per_step % H == 0
    grid = (NH // rows_per_step,)
    kern = functools.partial(_mnet_kernel, T=T, H=H)
    # NOTE: weights are grid-invariant and tiny here (~384 KiB bf16); if WC/T
    # grow, add pipeline_mode=pl.Buffered(1) on the weight specs to avoid
    # double-buffering them against v7x's 64 MiB VMEM.
    return pl.pallas_call(
        kern,
        out_shape=jax.ShapeDtypeStruct((NH, WC), jnp.float32),
        grid_spec=pltpu.PrefetchScalarGridSpec(
            num_scalar_prefetch=0,
            grid=grid,
            in_specs=[
                pl.BlockSpec((rows_per_step, WC), lambda g: (g, 0)),   # x
                pl.BlockSpec((T, 3 * WC, WC), lambda g: (0, 0, 0)),    # a1 bf16
                pl.BlockSpec((T, 1, WC), lambda g: (0, 0, 0)),         # b1
                pl.BlockSpec((T, 3 * WC, WC), lambda g: (0, 0, 0)),    # a2 bf16
                pl.BlockSpec((T, 1, WC), lambda g: (0, 0, 0)),         # b2
                pl.BlockSpec((1, WC), lambda g: (0, 0)),               # tau
            ],
            out_specs=pl.BlockSpec((rows_per_step, WC), lambda g: (g, 0)),
        ),
        compiler_params=pltpu.CompilerParams(
            dimension_semantics=("parallel",),
            vmem_limit_bytes=32 * 1024 * 1024),
    )(x_rows, p["a1"], p["b1"], p["a2"], p["b2"], p["tau_row"])


@functools.partial(jax.jit, static_argnames=("rows_per_step",))
def mnet_forward(x_nhwc, kernel_params, rows_per_step=None):
    """NHWC in / NHWC out.  No transposes — only free contiguous reshapes."""
    N, H, W, C = x_nhwc.shape
    y = mnet_rows(x_nhwc.reshape(N * H, W * C), kernel_params,
                  H=H, rows_per_step=rows_per_step)
    return y.reshape(N, H, W, C)


@jax.jit
def mnet_forward_nchw(x_nchw, kernel_params):
    """PyTorch-convention NCHW wrapper (adds two layout transposes; prefer the
    NHWC entry point in a production pipeline)."""
    x = jnp.transpose(x_nchw, (0, 2, 3, 1))
    return jnp.transpose(mnet_forward(x, kernel_params), (0, 3, 1, 2))


# ---------------------------------------------------------------------------
# Host-side weight preparation
# ---------------------------------------------------------------------------
def _band_matrix(k_hwio, W, C):
    """Fold the 3 horizontal (dw) taps + CxC channel mix of a 3x3 conv into a
    stacked (3*W*C, W*C) matrix; rows [dh*WC:(dh+1)*WC] hold the block-banded
    weights for vertical tap dh, matching the kernel's [x_dn | x | x_up] LHS."""
    k = np.asarray(jax.device_get(k_hwio), np.float32)   # (3, 3, C, C) HWIO
    WC = W * C
    A = np.zeros((3, WC, WC), np.float32)
    for dh in range(3):
        for w_out in range(W):
            for dw in range(3):
                w_in = w_out + dw - 1
                if 0 <= w_in < W:
                    A[dh, w_in * C:(w_in + 1) * C,
                      w_out * C:(w_out + 1) * C] = k[dh, dw]
    return A.reshape(3 * WC, WC)


def init_params(key, C, T, W):
    """Matches Mnet.__init__ parameter shapes (eval-mode BN folded)."""
    eps = 1e-5
    bound = (C * 9) ** -0.5            # PyTorch Conv2d kaiming-uniform bound
    WC = W * C

    # BatchNorm2d defaults: gamma=1, beta=0, running mean=0, running var=1.
    gamma = np.ones((C,), np.float32)
    beta = np.zeros((C,), np.float32)
    mean = np.zeros((C,), np.float32)
    var = np.ones((C,), np.float32)
    scale = gamma / np.sqrt(var + eps)
    scale_row = np.tile(scale, W)                         # (WC,)

    a1, b1, a2, b2, ref_blocks = [], [], [], [], []
    for t in range(T):
        k = jax.random.split(jax.random.fold_in(key, t), 4)
        w1 = jax.random.uniform(k[0], (3, 3, C, C), jnp.float32, -bound, bound)
        cb1 = jax.random.uniform(k[1], (C,), jnp.float32, -bound, bound)
        w2 = jax.random.uniform(k[2], (3, 3, C, C), jnp.float32, -bound, bound)
        cb2 = jax.random.uniform(k[3], (C,), jnp.float32, -bound, bound)
        bias1 = (np.asarray(jax.device_get(cb1)) - mean) * scale + beta
        bias2 = (np.asarray(jax.device_get(cb2)) - mean) * scale + beta
        # Fold BN scale into the stacked matmul weights (free at prep time).
        a1.append(_band_matrix(w1, W, C) * scale_row[None, :])
        a2.append(_band_matrix(w2, W, C) * scale_row[None, :])
        b1.append(np.tile(bias1, W))
        b2.append(np.tile(bias2, W))
        ref_blocks.append(dict(
            w1=w1, s1=jnp.asarray(scale).reshape(1, 1, 1, C),
            b1=jnp.asarray(bias1).reshape(1, 1, 1, C),
            w2=w2, s2=jnp.asarray(scale).reshape(1, 1, 1, C),
            b2=jnp.asarray(bias2).reshape(1, 1, 1, C)))

    kernel_params = dict(
        # bf16 weights: native MXU fast path + halves the dominant weight DMA.
        a1=jnp.asarray(np.stack(a1), jnp.bfloat16),        # (T, 3*WC, WC)
        b1=jnp.asarray(np.stack(b1).reshape(T, 1, WC), jnp.float32),
        a2=jnp.asarray(np.stack(a2), jnp.bfloat16),
        b2=jnp.asarray(np.stack(b2).reshape(T, 1, WC), jnp.float32),
        tau_row=jnp.full((1, WC), 0.5, jnp.float32),       # tau init 0.5
    )
    ref_params = dict(blocks=ref_blocks,
                      tau=jnp.full((1, 1, 1, C), 0.5, jnp.float32))
    return kernel_params, ref_params


# ---------------------------------------------------------------------------
# Pure-JAX f32 reference (for correctness check)
# ---------------------------------------------------------------------------
def ref_forward_nhwc(x, ref_params):
    dn = ("NHWC", "HWIO", "NHWC")
    M = x
    for p in ref_params["blocks"]:
        y = jax.lax.conv_general_dilated(M, p["w1"], (1, 1), "SAME",
                                         dimension_numbers=dn)
        y = jnp.maximum(y * p["s1"] + p["b1"], 0.0)
        y = jax.lax.conv_general_dilated(y, p["w2"], (1, 1), "SAME",
                                         dimension_numbers=dn)
        y = y * p["s2"] + p["b2"]
        M = jnp.maximum(M + y, 0.0)
    return jnp.maximum(M - ref_params["tau"], 0.0)


if __name__ == "__main__":
    # args.num_M = 8 channels, args.T = 2 residual blocks; W*C = 128 lanes.
    C, T, N, H, W = 8, 2, 2, 16, 16
    key = jax.random.PRNGKey(0)
    kparams, rparams = init_params(key, C, T, W)
    x_nhwc = jax.random.normal(jax.random.fold_in(key, 123),
                               (N, H, W, C), jnp.float32)

    out = jax.block_until_ready(mnet_forward(x_nhwc, kparams))
    ref = ref_forward_nhwc(x_nhwc, rparams)

    assert out.shape == (N, H, W, C)
    max_err = float(jnp.max(jnp.abs(out - ref)))
    # bf16 weights + bf16 activation operands at the MXU (f32 accumulate):
    # expected error vs the f32 reference is ~1e-2 worst case at these shapes,
    # far below any structural error (roll direction / mask / banding ~ O(1)).
    assert max_err < 5e-2, f"mismatch vs f32 reference: {max_err}"

    print("KERNEL_OK")
</pallas_src>

<mosaic_0001>
module attributes {stable_mosaic.version = 11 : i64} {
  func.func @_mnet_kernel(%arg0: i32, %arg1: memref<32x128xf32, #tpu.memory_space<vmem>>, %arg2: memref<2x384x128xbf16, #tpu.memory_space<vmem>>, %arg3: memref<2x1x128xf32, #tpu.memory_space<vmem>>, %arg4: memref<2x384x128xbf16, #tpu.memory_space<vmem>>, %arg5: memref<2x1x128xf32, #tpu.memory_space<vmem>>, %arg6: memref<1x128xf32, #tpu.memory_space<vmem>>, %arg7: memref<32x128xf32, #tpu.memory_space<vmem>>) attributes {dimension_semantics = [#tpu.dimension_semantics<parallel>], iteration_bounds = array<i64: 1>, scalar_prefetch = 0 : i64, scratch_operands = 0 : i64, tpu.core_type = #tpu.core_type<tc>, window_params = [{transform_indices = @transform_0, window_bounds = array<i64: 32, 128>}, {pipeline_mode = #tpu.pipeline_mode<synchronous>, transform_indices = @transform_1, window_bounds = array<i64: 2, 384, 128>}, {pipeline_mode = #tpu.pipeline_mode<synchronous>, transform_indices = @transform_2, window_bounds = array<i64: 2, 1, 128>}, {pipeline_mode = #tpu.pipeline_mode<synchronous>, transform_indices = @transform_3, window_bounds = array<i64: 2, 384, 128>}, {pipeline_mode = #tpu.pipeline_mode<synchronous>, transform_indices = @transform_4, window_bounds = array<i64: 2, 1, 128>}, {pipeline_mode = #tpu.pipeline_mode<synchronous>, transform_indices = @transform_5, window_bounds = array<i64: 1, 128>}, {transform_indices = @transform_6, window_bounds = array<i64: 32, 128>}]} {
    %0 = tpu.iota {dimensions = array<i32: 0>} : vector<32x128xi32>
    %c0_i32 = arith.constant 0 : i32
    %1 = vector.broadcast %c0_i32 : i32 to vector<32x128xi32>
    %2 = arith.cmpi eq, %0, %1 : vector<32x128xi32>
    %c16_i32 = arith.constant 16 : i32
    %3 = vector.broadcast %c16_i32 : i32 to vector<32x128xi32>
    %4 = arith.cmpi eq, %0, %3 : vector<32x128xi32>
    %5 = arith.ori %2, %4 : vector<32x128xi1>
    %c15_i32 = arith.constant 15 : i32
    %6 = vector.broadcast %c15_i32 : i32 to vector<32x128xi32>
    %7 = arith.cmpi eq, %0, %6 : vector<32x128xi32>
    %c31_i32 = arith.constant 31 : i32
    %8 = vector.broadcast %c31_i32 : i32 to vector<32x128xi32>
    %9 = arith.cmpi eq, %0, %8 : vector<32x128xi32>
    %10 = arith.ori %7, %9 : vector<32x128xi1>
    %c0 = arith.constant 0 : index
    %c0_0 = arith.constant 0 : index
    %11 = vector.load %arg1[%c0, %c0_0] : memref<32x128xf32, #tpu.memory_space<vmem>>, vector<32x128xf32>
    %c1_i32 = arith.constant 1 : i32
    %12 = tpu.dynamic_rotate %11 by %c1_i32 dim 0 : vector<32x128xf32>, i32 -> vector<32x128xf32>
    %cst = arith.constant 0.000000e+00 : f32
    %13 = vector.broadcast %cst : f32 to vector<32x128xf32>
    %14 = arith.select %5, %13, %12 : vector<32x128xi1>, vector<32x128xf32>
    %c31_i32_1 = arith.constant 31 : i32
    %15 = tpu.dynamic_rotate %11 by %c31_i32_1 dim 0 : vector<32x128xf32>, i32 -> vector<32x128xf32>
    %cst_2 = arith.constant 0.000000e+00 : f32
    %16 = vector.broadcast %cst_2 : f32 to vector<32x128xf32>
    %17 = arith.select %10, %16, %15 : vector<32x128xi1>, vector<32x128xf32>
    %18 = tpu.concatenate %14, %11, %17 in 1 : vector<32x128xf32>, vector<32x128xf32>, vector<32x128xf32> -> vector<32x384xf32>
    %19 = arith.truncf %18 : vector<32x384xf32> to vector<32x384xbf16>
    %c0_3 = arith.constant 0 : index
    %c0_4 = arith.constant 0 : index
    %c0_5 = arith.constant 0 : index
    %20 = vector.load %arg2[%c0_3, %c0_4, %c0_5] : memref<2x384x128xbf16, #tpu.memory_space<vmem>>, vector<1x384x128xbf16>
    %21 = vector.shape_cast %20 : vector<1x384x128xbf16> to vector<384x128xbf16>
    %cst_6 = arith.constant dense<0.000000e+00> : vector<32x128xf32>
    %22 = tpu.matmul %19, %21, %cst_6 {dimension_numbers = #tpu.dot_dimension_numbers<[1], [0], [0], [1], [0, 0, 1, 1], [], []>} : vector<32x384xbf16>, vector<384x128xbf16>, vector<32x128xf32> -> vector<32x128xf32>
    %c0_7 = arith.constant 0 : index
    %c0_8 = arith.constant 0 : index
    %c0_9 = arith.constant 0 : index
    %23 = vector.load %arg3[%c0_7, %c0_8, %c0_9] : memref<2x1x128xf32, #tpu.memory_space<vmem>>, vector<1x1x128xf32>
    %24 = vector.shape_cast %23 : vector<1x1x128xf32> to vector<1x128xf32>
    %25 = vector.broadcast %24 : vector<1x128xf32> to vector<32x128xf32>
    %26 = arith.addf %22, %25 : vector<32x128xf32>
    %cst_10 = arith.constant 0.000000e+00 : f32
    %27 = vector.broadcast %cst_10 : f32 to vector<32x128xf32>
    %28 = arith.maximumf %26, %27 : vector<32x128xf32>
    %c1_i32_11 = arith.constant 1 : i32
    %29 = tpu.dynamic_rotate %28 by %c1_i32_11 dim 0 : vector<32x128xf32>, i32 -> vector<32x128xf32>
    %cst_12 = arith.constant 0.000000e+00 : f32
    %30 = vector.broadcast %cst_12 : f32 to vector<32x128xf32>
    %31 = arith.select %5, %30, %29 : vector<32x128xi1>, vector<32x128xf32>
    %c31_i32_13 = arith.constant 31 : i32
    %32 = tpu.dynamic_rotate %28 by %c31_i32_13 dim 0 : vector<32x128xf32>, i32 -> vector<32x128xf32>
    %cst_14 = arith.constant 0.000000e+00 : f32
    %33 = vector.broadcast %cst_14 : f32 to vector<32x128xf32>
    %34 = arith.select %10, %33, %32 : vector<32x128xi1>, vector<32x128xf32>
    %35 = tpu.concatenate %31, %28, %34 in 1 : vector<32x128xf32>, vector<32x128xf32>, vector<32x128xf32> -> vector<32x384xf32>
    %36 = arith.truncf %35 : vector<32x384xf32> to vector<32x384xbf16>
    %c0_15 = arith.constant 0 : index
    %c0_16 = arith.constant 0 : index
    %c0_17 = arith.constant 0 : index
    %37 = vector.load %arg4[%c0_15, %c0_16, %c0_17] : memref<2x384x128xbf16, #tpu.memory_space<vmem>>, vector<1x384x128xbf16>
    %38 = vector.shape_cast %37 : vector<1x384x128xbf16> to vector<384x128xbf16>
    %cst_18 = arith.constant dense<0.000000e+00> : vector<32x128xf32>
    %39 = tpu.matmul %36, %38, %cst_18 {dimension_numbers = #tpu.dot_dimension_numbers<[1], [0], [0], [1], [0, 0, 1, 1], [], []>} : vector<32x384xbf16>, vector<384x128xbf16>, vector<32x128xf32> -> vector<32x128xf32>
    %40 = arith.addf %11, %39 : vector<32x128xf32>
    %c0_19 = arith.constant 0 : index
    %c0_20 = arith.constant 0 : index
    %c0_21 = arith.constant 0 : index
    %41 = vector.load %arg5[%c0_19, %c0_20, %c0_21] : memref<2x1x128xf32, #tpu.memory_space<vmem>>, vector<1x1x128xf32>
    %42 = vector.shape_cast %41 : vector<1x1x128xf32> to vector<1x128xf32>
    %43 = vector.broadcast %42 : vector<1x128xf32> to vector<32x128xf32>
    %44 = arith.addf %40, %43 : vector<32x128xf32>
    %cst_22 = arith.constant 0.000000e+00 : f32
    %45 = vector.broadcast %cst_22 : f32 to vector<32x128xf32>
    %46 = arith.maximumf %44, %45 : vector<32x128xf32>
    %c1_i32_23 = arith.constant 1 : i32
    %47 = tpu.dynamic_rotate %46 by %c1_i32_23 dim 0 : vector<32x128xf32>, i32 -> vector<32x128xf32>
    %cst_24 = arith.constant 0.000000e+00 : f32
    %48 = vector.broadcast %cst_24 : f32 to vector<32x128xf32>
    %49 = arith.select %5, %48, %47 : vector<32x128xi1>, vector<32x128xf32>
    %c31_i32_25 = arith.constant 31 : i32
    %50 = tpu.dynamic_rotate %46 by %c31_i32_25 dim 0 : vector<32x128xf32>, i32 -> vector<32x128xf32>
    %cst_26 = arith.constant 0.000000e+00 : f32
    %51 = vector.broadcast %cst_26 : f32 to vector<32x128xf32>
    %52 = arith.select %10, %51, %50 : vector<32x128xi1>, vector<32x128xf32>
    %53 = tpu.concatenate %49, %46, %52 in 1 : vector<32x128xf32>, vector<32x128xf32>, vector<32x128xf32> -> vector<32x384xf32>
    %54 = arith.truncf %53 : vector<32x384xf32> to vector<32x384xbf16>
    %c1 = arith.constant 1 : index
    %c0_27 = arith.constant 0 : index
    %c0_28 = arith.constant 0 : index
    %55 = vector.load %arg2[%c1, %c0_27, %c0_28] : memref<2x384x128xbf16, #tpu.memory_space<vmem>>, vector<1x384x128xbf16>
    %56 = vector.shape_cast %55 : vector<1x384x128xbf16> to vector<384x128xbf16>
    %cst_29 = arith.constant dense<0.000000e+00> : vector<32x128xf32>
    %57 = tpu.matmul %54, %56, %cst_29 {dimension_numbers = #tpu.dot_dimension_numbers<[1], [0], [0], [1], [0, 0, 1, 1], [], []>} : vector<32x384xbf16>, vector<384x128xbf16>, vector<32x128xf32> -> vector<32x128xf32>
    %c1_30 = arith.constant 1 : index
    %c0_31 = arith.constant 0 : index
    %c0_32 = arith.constant 0 : index
    %58 = vector.load %arg3[%c1_30, %c0_31, %c0_32] : memref<2x1x128xf32, #tpu.memory_space<vmem>>, vector<1x1x128xf32>
    %59 = vector.shape_cast %58 : vector<1x1x128xf32> to vector<1x128xf32>
    %60 = vector.broadcast %59 : vector<1x128xf32> to vector<32x128xf32>
    %61 = arith.addf %57, %60 : vector<32x128xf32>
    %cst_33 = arith.constant 0.000000e+00 : f32
    %62 = vector.broadcast %cst_33 : f32 to vector<32x128xf32>
    %63 = arith.maximumf %61, %62 : vector<32x128xf32>
    %c1_i32_34 = arith.constant 1 : i32
    %64 = tpu.dynamic_rotate %63 by %c1_i32_34 dim 0 : vector<32x128xf32>, i32 -> vector<32x128xf32>
    %cst_35 = arith.constant 0.000000e+00 : f32
    %65 = vector.broadcast %cst_35 : f32 to vector<32x128xf32>
    %66 = arith.select %5, %65, %64 : vector<32x128xi1>, vector<32x128xf32>
    %c31_i32_36 = arith.constant 31 : i32
    %67 = tpu.dynamic_rotate %63 by %c31_i32_36 dim 0 : vector<32x128xf32>, i32 -> vector<32x128xf32>
    %cst_37 = arith.constant 0.000000e+00 : f32
    %68 = vector.broadcast %cst_37 : f32 to vector<32x128xf32>
    %69 = arith.select %10, %68, %67 : vector<32x128xi1>, vector<32x128xf32>
    %70 = tpu.concatenate %66, %63, %69 in 1 : vector<32x128xf32>, vector<32x128xf32>, vector<32x128xf32> -> vector<32x384xf32>
    %71 = arith.truncf %70 : vector<32x384xf32> to vector<32x384xbf16>
    %c1_38 = arith.constant 1 : index
    %c0_39 = arith.constant 0 : index
    %c0_40 = arith.constant 0 : index
    %72 = vector.load %arg4[%c1_38, %c0_39, %c0_40] : memref<2x384x128xbf16, #tpu.memory_space<vmem>>, vector<1x384x128xbf16>
    %73 = vector.shape_cast %72 : vector<1x384x128xbf16> to vector<384x128xbf16>
    %cst_41 = arith.constant dense<0.000000e+00> : vector<32x128xf32>
    %74 = tpu.matmul %71, %73, %cst_41 {dimension_numbers = #tpu.dot_dimension_numbers<[1], [0], [0], [1], [0, 0, 1, 1], [], []>} : vector<32x384xbf16>, vector<384x128xbf16>, vector<32x128xf32> -> vector<32x128xf32>
    %75 = arith.addf %46, %74 : vector<32x128xf32>
    %c1_42 = arith.constant 1 : index
    %c0_43 = arith.constant 0 : index
    %c0_44 = arith.constant 0 : index
    %76 = vector.load %arg5[%c1_42, %c0_43, %c0_44] : memref<2x1x128xf32, #tpu.memory_space<vmem>>, vector<1x1x128xf32>
    %77 = vector.shape_cast %76 : vector<1x1x128xf32> to vector<1x128xf32>
    %78 = vector.broadcast %77 : vector<1x128xf32> to vector<32x128xf32>
    %79 = arith.addf %75, %78 : vector<32x128xf32>
    %cst_45 = arith.constant 0.000000e+00 : f32
    %80 = vector.broadcast %cst_45 : f32 to vector<32x128xf32>
    %81 = arith.maximumf %79, %80 : vector<32x128xf32>
    %c0_46 = arith.constant 0 : index
    %c0_47 = arith.constant 0 : index
    %82 = vector.load %arg6[%c0_46, %c0_47] : memref<1x128xf32, #tpu.memory_space<vmem>>, vector<1x128xf32>
    %83 = vector.broadcast %82 : vector<1x128xf32> to vector<32x128xf32>
    %84 = arith.subf %81, %83 : vector<32x128xf32>
    %cst_48 = arith.constant 0.000000e+00 : f32
    %85 = vector.broadcast %cst_48 : f32 to vector<32x128xf32>
    %86 = arith.maximumf %84, %85 : vector<32x128xf32>
    %c0_49 = arith.constant 0 : index
    %c0_50 = arith.constant 0 : index
    %87 = vector.load %arg7[%c0_49, %c0_50] : memref<32x128xf32, #tpu.memory_space<vmem>>, vector<32x128xf32>
    tpu.vector_store %arg7[%c0_49, %c0_50], %86 {strides = array<i32>} : memref<32x128xf32, #tpu.memory_space<vmem>>, vector<32x128xf32>,
    return
  }
  func.func @transform_0(%arg0: i32) -> (i32, i32) {
    %c0_i32 = arith.constant 0 : i32
    %c0_i32_0 = arith.constant 0 : i32
    return %arg0, %c0_i32 : i32, i32
  }
  func.func @transform_1(%arg0: i32) -> (i32, i32, i32) {
    %c0_i32 = arith.constant 0 : i32
    %c0_i32_0 = arith.constant 0 : i32
    %c0_i32_1 = arith.constant 0 : i32
    %c0_i32_2 = arith.constant 0 : i32
    return %c0_i32, %c0_i32_0, %c0_i32_1 : i32, i32, i32
  }
  func.func @transform_2(%arg0: i32) -> (i32, i32, i32) {
    %c0_i32 = arith.constant 0 : i32
    %c0_i32_0 = arith.constant 0 : i32
    %c0_i32_1 = arith.constant 0 : i32
    %c0_i32_2 = arith.constant 0 : i32
    return %c0_i32, %c0_i32_0, %c0_i32_1 : i32, i32, i32
  }
  func.func @transform_3(%arg0: i32) -> (i32, i32, i32) {
    %c0_i32 = arith.constant 0 : i32
    %c0_i32_0 = arith.constant 0 : i32
    %c0_i32_1 = arith.constant 0 : i32
    %c0_i32_2 = arith.constant 0 : i32
    return %c0_i32, %c0_i32_0, %c0_i32_1 : i32, i32, i32
  }
  func.func @transform_4(%arg0: i32) -> (i32, i32, i32) {
    %c0_i32 = arith.constant 0 : i32
    %c0_i32_0 = arith.constant 0 : i32
    %c0_i32_1 = arith.constant 0 : i32
    %c0_i32_2 = arith.constant 0 : i32
    return %c0_i32, %c0_i32_0, %c0_i32_1 : i32, i32, i32
  }
  func.func @transform_5(%arg0: i32) -> (i32, i32) {
    %c0_i32 = arith.constant 0 : i32
    %c0_i32_0 = arith.constant 0 : i32
    %c0_i32_1 = arith.constant 0 : i32
    return %c0_i32, %c0_i32_0 : i32, i32
  }
  func.func @transform_6(%arg0: i32) -> (i32, i32) {
    %c0_i32 = arith.constant 0 : i32
    %c0_i32_0 = arith.constant 0 : i32
    return %arg0, %c0_i32 : i32, i32
  }
}

</mosaic_0001>

<llo_original>
// kernel: mnet_forward.1
$region0: #{mnet_forward.1}
  #allocation0 [shape = 'u32[]', space=smem, size = 0x4, offset = 0x4, fixed_abs, tag = 'smem constant byte address 0x4 - core index']
  #allocation1 [shape = 'u32[144,128]{1,0:T(1,128)}', space=vmem, size = 0x12000, scoped, tag = 'internal scratch']
  %s0 = inlined_call_operand.vmem [shape: f32[32,128], index: 0, kind: input, shape index: {}]
  %s1 = inlined_call_operand.vmem [shape: bf16[2,384,128], index: 1, kind: input, shape index: {}]
  %s2 = inlined_call_operand.vmem [shape: f32[2,1,128], index: 2, kind: input, shape index: {}]
  %s3 = inlined_call_operand.vmem [shape: bf16[2,384,128], index: 3, kind: input, shape index: {}]
  %s4 = inlined_call_operand.vmem [shape: f32[2,1,128], index: 4, kind: input, shape index: {}]
  %s5 = inlined_call_operand.vmem [shape: f32[1,128], index: 5, kind: input, shape index: {}]
  %s6 = inlined_call_operand.vmem [shape: f32[32,128], index: 6, kind: output, shape index: {}]
  %s7 = sld [smem:[#allocation0]]
  $region34: #{mnet_forward.1} parent=0
    _
  %s9 = ssub.s32 1, %s7
  %s10 = scalar_select 0, %s9, %s7
  // Predicated region
  $region2: #{mnet_forward.1} parent=0 // pred_check
    _
  $region3: #{mnet_forward.1} parent=0 // pred_check_branch
    %12 = sbr.rel (0) target = $region5
  $region4: #{mnet_forward.1} parent=0 // pred_region
    _
  $region5: #{mnet_forward.1} parent=0 // pred_fallthru
    _
  // Predicated region
  $region6: #{mnet_forward.1} parent=0 // pred_check
    _
  $region7: #{mnet_forward.1} parent=0 // pred_check_branch
    %14 = sbr.rel (0) target = $region9
  $region8: #{mnet_forward.1} parent=0 // pred_region
    _
  $region9: #{mnet_forward.1} parent=0 // pred_fallthru
    _
  // Predicated region
  $region10: #{mnet_forward.1} parent=0 // pred_check
    _
  $region11: #{mnet_forward.1} parent=0 // pred_check_branch
    %16 = sbr.rel (0) target = $region13
  $region12: #{mnet_forward.1} parent=0 // pred_region
    _
  $region13: #{mnet_forward.1} parent=0 // pred_fallthru
    _
  // Predicated region
  $region14: #{mnet_forward.1} parent=0 // pred_check
    _
  $region15: #{mnet_forward.1} parent=0 // pred_check_branch
    %18 = sbr.rel (0) target = $region17
  $region16: #{mnet_forward.1} parent=0 // pred_region
    _
  $region17: #{mnet_forward.1} parent=0 // pred_fallthru
    _
  // Predicated region
  $region18: #{mnet_forward.1} parent=0 // pred_check
    _
  $region19: #{mnet_forward.1} parent=0 // pred_check_branch
    %20 = sbr.rel (0) target = $region21
  $region20: #{mnet_forward.1} parent=0 // pred_region
    _
  $region21: #{mnet_forward.1} parent=0 // pred_fallthru
    _
  // Predicated region
  $region22: #{mnet_forward.1} parent=0 // pred_check
    _
  $region23: #{mnet_forward.1} parent=0 // pred_check_branch
    %22 = sbr.rel (0) target = $region25
  $region24: #{mnet_forward.1} parent=0 // pred_region
    _
  $region25: #{mnet_forward.1} parent=0 // pred_fallthru
    _
  %v24 = vlaneseq
  %v25 = vshrl.u32 %v24, 7
  %v26 = vadd.s32 %v25, 8
  %v27 = vadd.s32 %v25, 16
  %v28 = vadd.s32 %v25, 24
  %vm29 = vcmp.eq.s32.totalorder %v25, 0
  %vm30 = vcmp.eq.s32.totalorder %v26, 0
  %vm31 = vcmp.eq.s32.totalorder %v27, 0
  %vm32 = vcmp.eq.s32.totalorder %v28, 0
  %vm33 = vcmp.eq.s32.totalorder %v25, 16
  %vm34 = vcmp.eq.s32.totalorder %v26, 16
  %vm35 = vcmp.eq.s32.totalorder %v27, 16
  %vm36 = vcmp.eq.s32.totalorder %v28, 16
  %vm37 = vmor %vm29, %vm33
  %vm38 = vmor %vm30, %vm34
  %vm39 = vmor %vm31, %vm35
  %vm40 = vmor %vm32, %vm36
  %vm41 = vcmp.eq.s32.totalorder %v25, 15
  %vm42 = vcmp.eq.s32.totalorder %v26, 15
  %vm43 = vcmp.eq.s32.totalorder %v27, 15
  %vm44 = vcmp.eq.s32.totalorder %v28, 15
  %vm45 = vcmp.eq.s32.totalorder %v25, 31
  %vm46 = vcmp.eq.s32.totalorder %v26, 31
  %vm47 = vcmp.eq.s32.totalorder %v27, 31
  %vm48 = vcmp.eq.s32.totalorder %v28, 31
  %vm49 = vmor %vm41, %vm45
  %vm50 = vmor %vm42, %vm46
  %vm51 = vmor %vm43, %vm47
  %vm52 = vmor %vm44, %vm48
  %v53 = vld [vmem:[%s0] sm:$0xff]
  %v54 = vld [vmem:[%s0 + $0x8] sm:$0xff]
  %v55 = vld [vmem:[%s0 + $0x10] sm:$0xff]
  %v56 = vld [vmem:[%s0 + $0x18] sm:$0xff]
  %v57 = vrot.slane %v53, 7
  %v58 = vrot.slane %v54, 7
  %v59 = vrot.slane %v55, 7
  %v60 = vrot.slane %v56, 7
  %vm61 = vcmp.lt.s32.totalorder %v25, 1
  %v62 = vsel %vm61, %v59, %v60
  %v63 = vsel %vm61, %v58, %v59
  %v64 = vsel %vm61, %v57, %v58
  %v65 = vsel %vm61, %v60, %v57
  %v66 = vsel %vm37, 0.0, %v65
  %v67 = vsel %vm38, 0.0, %v64
  %v68 = vsel %vm39, 0.0, %v63
  %v69 = vsel %vm40, 0.0, %v62
  %v70 = vrot.slane %v53, 1
  %v71 = vrot.slane %v54, 1
  %v72 = vrot.slane %v55, 1
  %v73 = vrot.slane %v56, 1
  %vm74 = vcmp.lt.s32.totalorder %v25, 7
  %v75 = vsel %vm74, %v72, %v73
  %v76 = vsel %vm74, %v71, %v72
  %v77 = vsel %vm74, %v70, %v71
  %v78 = vsel %vm74, %v73, %v70
  %v79 = vsel %vm49, 0.0, %v77
  %v80 = vsel %vm50, 0.0, %v76
  %v81 = vsel %vm51, 0.0, %v75
  %v82 = vsel %vm52, 0.0, %v78
  %v83 = vpack.c.bf16 %v67, %v66
  %v84 = vpack.c.bf16 %v54, %v53
  %v85 = vpack.c.bf16 %v80, %v79
  %v86 = vpack.c.bf16 %v69, %v68
  %v87 = vpack.c.bf16 %v56, %v55
  %v88 = vpack.c.bf16 %v82, %v81
  %v89 = vld [vmem:[%s1] sm:$0xf]
  %v90 = vld [vmem:[%s1 + $0x4] sm:$0xf]
  %v91 = vld [vmem:[%s1 + $0x8] sm:$0xf]
  %v92 = vld [vmem:[%s1 + $0xc] sm:$0xf]
  %v93 = vld [vmem:[%s1 + $0x10] sm:$0xf]
  %v94 = vld [vmem:[%s1 + $0x14] sm:$0xf]
  %v95 = vld [vmem:[%s1 + $0x18] sm:$0xf]
  %v96 = vld [vmem:[%s1 + $0x1c] sm:$0xf]
  %v97 = vld [vmem:[%s1 + $0x20] sm:$0xf]
  %v98 = vld [vmem:[%s1 + $0x24] sm:$0xf]
  %v99 = vld [vmem:[%s1 + $0x28] sm:$0xf]
  %v100 = vld [vmem:[%s1 + $0x2c] sm:$0xf]
  %v101 = vld [vmem:[%s1 + $0x30] sm:$0xf]
  %v102 = vld [vmem:[%s1 + $0x34] sm:$0xf]
  %v103 = vld [vmem:[%s1 + $0x38] sm:$0xf]
  %v104 = vld [vmem:[%s1 + $0x3c] sm:$0xf]
  %v105 = vld [vmem:[%s1 + $0x40] sm:$0xf]
  %v106 = vld [vmem:[%s1 + $0x44] sm:$0xf]
  %v107 = vld [vmem:[%s1 + $0x48] sm:$0xf]
  %v108 = vld [vmem:[%s1 + $0x4c] sm:$0xf]
  %v109 = vld [vmem:[%s1 + $0x50] sm:$0xf]
  %v110 = vld [vmem:[%s1 + $0x54] sm:$0xf]
  %v111 = vld [vmem:[%s1 + $0x58] sm:$0xf]
  %v112 = vld [vmem:[%s1 + $0x5c] sm:$0xf]
  %v113 = vld [vmem:[%s1 + $0x60] sm:$0xf]
  %v114 = vld [vmem:[%s1 + $0x64] sm:$0xf]
  %v115 = vld [vmem:[%s1 + $0x68] sm:$0xf]
  %v116 = vld [vmem:[%s1 + $0x6c] sm:$0xf]
  %v117 = vld [vmem:[%s1 + $0x70] sm:$0xf]
  %v118 = vld [vmem:[%s1 + $0x74] sm:$0xf]
  %v119 = vld [vmem:[%s1 + $0x78] sm:$0xf]
  %v120 = vld [vmem:[%s1 + $0x7c] sm:$0xf]
  %v121 = vld [vmem:[%s1 + $0x80] sm:$0xf]
  %v122 = vld [vmem:[%s1 + $0x84] sm:$0xf]
  %v123 = vld [vmem:[%s1 + $0x88] sm:$0xf]
  %v124 = vld [vmem:[%s1 + $0x8c] sm:$0xf]
  %v125 = vld [vmem:[%s1 + $0x90] sm:$0xf]
  %v126 = vld [vmem:[%s1 + $0x94] sm:$0xf]
  %v127 = vld [vmem:[%s1 + $0x98] sm:$0xf]
  %v128 = vld [vmem:[%s1 + $0x9c] sm:$0xf]
  %v129 = vld [vmem:[%s1 + $0xa0] sm:$0xf]
  %v130 = vld [vmem:[%s1 + $0xa4] sm:$0xf]
  %v131 = vld [vmem:[%s1 + $0xa8] sm:$0xf]
  %v132 = vld [vmem:[%s1 + $0xac] sm:$0xf]
  %v133 = vld [vmem:[%s1 + $0xb0] sm:$0xf]
  %v134 = vld [vmem:[%s1 + $0xb4] sm:$0xf]
  %v135 = vld [vmem:[%s1 + $0xb8] sm:$0xf]
  %v136 = vld [vmem:[%s1 + $0xbc] sm:$0xf]
  %v137 = vld [vmem:[%s2] sm:$0x1]
  %v139 = vlaneseq
  %v140 = vshrl.u32 %v139, 7
  %v141 = vsub.s32 0, %v140
  %v142 = vrot.slane %v137, %v141
  %v192 = vunpack.c.l.b16 %v89
  %v193 = vunpack.c.l.b16 %v90
  %v194 = vunpack.c.l.b16 %v91
  %v195 = vunpack.c.l.b16 %v92
  %v196 = vunpack.c.l.b16 %v93
  %v197 = vunpack.c.l.b16 %v94
  %v198 = vunpack.c.l.b16 %v95
  %v199 = vunpack.c.l.b16 %v96
  %v200 = vunpack.c.l.b16 %v97
  %v201 = vunpack.c.l.b16 %v98
  %v202 = vunpack.c.l.b16 %v99
  %v203 = vunpack.c.l.b16 %v100
  %v204 = vunpack.c.l.b16 %v101
  %v205 = vunpack.c.l.b16 %v102
  %v206 = vunpack.c.l.b16 %v103
  %v207 = vunpack.c.l.b16 %v104
  %v208 = vunpack.c.l.b16 %v105
  %v209 = vunpack.c.l.b16 %v106
  %v210 = vunpack.c.l.b16 %v107
  %v211 = vunpack.c.l.b16 %v108
  %v212 = vunpack.c.l.b16 %v109
  %v213 = vunpack.c.l.b16 %v110
  %v214 = vunpack.c.l.b16 %v111
  %v215 = vunpack.c.l.b16 %v112
  %v216 = vunpack.c.l.b16 %v113
  %v217 = vunpack.c.l.b16 %v114
  %v218 = vunpack.c.l.b16 %v115
  %v219 = vunpack.c.l.b16 %v116
  %v220 = vunpack.c.l.b16 %v117
  %v221 = vunpack.c.l.b16 %v118
  %v222 = vunpack.c.l.b16 %v119
  %v223 = vunpack.c.l.b16 %v120
  %v224 = vunpack.c.l.b16 %v121
  %v225 = vunpack.c.l.b16 %v122
  %v226 = vunpack.c.l.b16 %v123
  %v227 = vunpack.c.l.b16 %v124
  %v228 = vunpack.c.l.b16 %v125
  %v229 = vunpack.c.l.b16 %v126
  %v230 = vunpack.c.l.b16 %v127
  %v231 = vunpack.c.l.b16 %v128
  %v232 = vunpack.c.l.b16 %v129
  %v233 = vunpack.c.l.b16 %v130
  %v234 = vunpack.c.l.b16 %v131
  %v235 = vunpack.c.l.b16 %v132
  %v236 = vunpack.c.l.b16 %v133
  %v237 = vunpack.c.l.b16 %v134
  %v238 = vunpack.c.l.b16 %v135
  %v239 = vunpack.c.l.b16 %v136
  %v240 = vpack.c.b16 %v193, %v192
  %v241 = vpack.c.b16 %v195, %v194
  %v242 = vpack.c.b16 %v197, %v196
  %v243 = vpack.c.b16 %v199, %v198
  %v244 = vpack.c.b16 %v201, %v200
  %v245 = vpack.c.b16 %v203, %v202
  %v246 = vpack.c.b16 %v205, %v204
  %v247 = vpack.c.b16 %v207, %v206
  %v248 = vpack.c.b16 %v209, %v208
  %v249 = vpack.c.b16 %v211, %v210
  %v250 = vpack.c.b16 %v213, %v212
  %v251 = vpack.c.b16 %v215, %v214
  %v252 = vpack.c.b16 %v217, %v216
  %v253 = vpack.c.b16 %v219, %v218
  %v254 = vpack.c.b16 %v221, %v220
  %v255 = vpack.c.b16 %v223, %v222
  %v256 = vpack.c.b16 %v225, %v224
  %v257 = vpack.c.b16 %v227, %v226
  %v258 = vpack.c.b16 %v229, %v228
  %v259 = vpack.c.b16 %v231, %v230
  %v260 = vpack.c.b16 %v233, %v232
  %v261 = vpack.c.b16 %v235, %v234
  %v262 = vpack.c.b16 %v237, %v236
  %v263 = vpack.c.b16 %v239, %v238
  %288 = vmatprep.subr.bf16.mxu0 0
  %289 = vmatpush1.bf16.msra.mxu0 %v240
  %290 = vmatprep.subr.bf16.mxu0 0
  %291 = vmatpush1.bf16.msra.mxu0 %v241
  %292 = vmatprep.subr.bf16.mxu0 0
  %293 = vmatpush1.bf16.msra.mxu0 %v242
  %294 = vmatprep.subr.bf16.mxu0 0
  %295 = vmatpush1.bf16.msra.mxu0 %v243
  %296 = vmatprep.subr.bf16.mxu0 0
  %297 = vmatpush1.bf16.msra.mxu0 %v244
  %298 = vmatprep.subr.bf16.mxu0 0
  %299 = vmatpush1.bf16.msra.mxu0 %v245
  %300 = vmatprep.subr.bf16.mxu0 0
  %301 = vmatpush1.bf16.msra.mxu0 %v246
  %302 = vmatprep.subr.bf16.mxu0 0
  %303 = vmatpush1.bf16.msra.mxu0 %v247
  %304 = vmatprep.subr.bf16.mxu0 0
  %305 = vmatpush1.bf16.msra.mxu0 %v248
  %306 = vmatprep.subr.bf16.mxu0 0
  %307 = vmatpush1.bf16.msra.mxu0 %v249
  %308 = vmatprep.subr.bf16.mxu0 0
  %309 = vmatpush1.bf16.msra.mxu0 %v250
  %310 = vmatprep.subr.bf16.mxu0 0
  %311 = vmatpush1.bf16.msra.mxu0 %v251
  %312 = vmatprep.subr.bf16.mxu0 0
  %313 = vmatpush1.bf16.msra.mxu0 %v252
  %314 = vmatprep.subr.bf16.mxu0 0
  %315 = vmatpush1.bf16.msra.mxu0 %v253
  %316 = vmatprep.subr.bf16.mxu0 0
  %317 = vmatpush1.bf16.msra.mxu0 %v254
  %318 = vmatprep.subr.bf16.mxu0 0
  %319 = vmatpush1.bf16.msra.mxu0 %v255
  %320 = vmatprep.mubr.bf16.mxu0 %v84
  %321 = vmatmul.mubr.bf16.gmra.mrb[0].mxu0 %v83
  %v322 = vpop.f32.mrb[0].mxu0
  %v323 = vadd.f32 %v142, %v322
  %v324 = vpop.f32.mrb[0].mxu0
  %v325 = vpop.f32.mrb[0].mxu0
  %v326 = vadd.f32 %v142, %v325
  %v327 = vpop.f32.mrb[0].mxu0
  %328 = vmatprep.mubr.bf16.mxu0 %v87
  %329 = vmatmul.mubr.bf16.gmra.mrb[0].mxu0 %v86
  %v330 = vpop.f32.mrb[0].mxu0
  %v331 = vadd.f32 %v142, %v330
  %v332 = vpop.f32.mrb[0].mxu0
  %v333 = vpop.f32.mrb[0].mxu0
  %v334 = vadd.f32 %v142, %v333
  %v335 = vpop.f32.mrb[0].mxu0
  %336 = vdwg.mxu0
  %337 = vmatprep.subr.bf16.mxu0 0
  %338 = vmatpush1.bf16.msra.mxu0 %v256
  %339 = vmatprep.subr.bf16.mxu0 0
  %340 = vmatpush1.bf16.msra.mxu0 %v257
  %341 = vmatprep.subr.bf16.mxu0 0
  %342 = vmatpush1.bf16.msra.mxu0 %v258
  %343 = vmatprep.subr.bf16.mxu0 0
  %344 = vmatpush1.bf16.msra.mxu0 %v259
  %345 = vmatprep.subr.bf16.mxu0 0
  %346 = vmatpush1.bf16.msra.mxu0 %v260
  %347 = vmatprep.subr.bf16.mxu0 0
  %348 = vmatpush1.bf16.msra.mxu0 %v261
  %349 = vmatprep.subr.bf16.mxu0 0
  %350 = vmatpush1.bf16.msra.mxu0 %v262
  %351 = vmatprep.subr.bf16.mxu0 0
  %352 = vmatpush1.bf16.msra.mxu0 %v263
  %353 = vmatprep.subr.bf16.mxu0 0
  %354 = vmatpush1.bf16.msra.mxu0 0
  %355 = vmatprep.subr.bf16.mxu0 0
  %356 = vmatpush1.bf16.msra.mxu0 0
  %357 = vmatprep.subr.bf16.mxu0 0
  %358 = vmatpush1.bf16.msra.mxu0 0
  %359 = vmatprep.subr.bf16.mxu0 0
  %360 = vmatpush1.bf16.msra.mxu0 0
  %361 = vmatprep.subr.bf16.mxu0 0
  %362 = vmatpush1.bf16.msra.mxu0 0
  %363 = vmatprep.subr.bf16.mxu0 0
  %364 = vmatpush1.bf16.msra.mxu0 0
  %365 = vmatprep.subr.bf16.mxu0 0
  %366 = vmatpush1.bf16.msra.mxu0 0
  %367 = vmatprep.subr.bf16.mxu0 0
  %368 = vmatpush1.bf16.msra.mxu0 0
  %369 = vmatprep.mubr.bf16.mxu0 0
  %370 = vmatmul.mubr.bf16.gmra.mrb[0].mxu0 %v85
  %v371 = vpop.f32.mrb[0].mxu0
  %v372 = vadd.f32 %v323, %v371
  %v373 = vpop.f32.mrb[0].mxu0
  %v374 = vpop.f32.mrb[0].mxu0
  %v375 = vadd.f32 %v326, %v374
  %v376 = vpop.f32.mrb[0].mxu0
  %377 = vmatprep.mubr.bf16.mxu0 0
  %378 = vmatmul.mubr.bf16.gmra.mrb[0].mxu0 %v88
  %v379 = vpop.f32.mrb[0].mxu0
  %v380 = vadd.f32 %v331, %v379
  %v381 = vpop.f32.mrb[0].mxu0
  %v382 = vpop.f32.mrb[0].mxu0
  %v383 = vadd.f32 %v334, %v382
  %v384 = vpop.f32.mrb[0].mxu0
  %385 = vdwg.mxu0
  %v386 = vmax.f32 %v372, 0.0
  %v387 = vmax.f32 %v375, 0.0
  %v388 = vmax.f32 %v380, 0.0
  %v389 = vmax.f32 %v383, 0.0
  %v390 = vrot.slane %v386, 7
  %v391 = vrot.slane %v387, 7
  %v392 = vrot.slane %v388, 7
  %v393 = vrot.slane %v389, 7
  %v394 = vsel %vm61, %v392, %v393
  %v395 = vsel %vm61, %v391, %v392
  %v396 = vsel %vm61, %v390, %v391
  %v397 = vsel %vm61, %v393, %v390
  %v398 = vsel %vm37, 0.0, %v397
  %v399 = vsel %vm38, 0.0, %v396
  %v400 = vsel %vm39, 0.0, %v395
  %v401 = vsel %vm40, 0.0, %v394
  %v402 = vrot.slane %v386, 1
  %v403 = vrot.slane %v387, 1
  %v404 = vrot.slane %v388, 1
  %v405 = vrot.slane %v389, 1
  %v406 = vsel %vm74, %v404, %v405
  %v407 = vsel %vm74, %v403, %v404
  %v408 = vsel %vm74, %v402, %v403
  %v409 = vsel %vm74, %v405, %v402
  %v410 = vsel %vm49, 0.0, %v408
  %v411 = vsel %vm50, 0.0, %v407
  %v412 = vsel %vm51, 0.0, %v406
  %v413 = vsel %vm52, 0.0, %v409
  %v414 = vpack.c.bf16 %v399, %v398
  %v415 = vpack.c.bf16 %v387, %v386
  %v416 = vpack.c.bf16 %v411, %v410
  %v417 = vpack.c.bf16 %v401, %v400
  %v418 = vpack.c.bf16 %v389, %v388
  %v419 = vpack.c.bf16 %v413, %v412
  %v420 = vld [vmem:[%s3] sm:$0xf]
  %v421 = vld [vmem:[%s3 + $0x4] sm:$0xf]
  %v422 = vld [vmem:[%s3 + $0x8] sm:$0xf]
  %v423 = vld [vmem:[%s3 + $0xc] sm:$0xf]
  %v424 = vld [vmem:[%s3 + $0x10] sm:$0xf]
  %v425 = vld [vmem:[%s3 + $0x14] sm:$0xf]
  %v426 = vld [vmem:[%s3 + $0x18] sm:$0xf]
  %v427 = vld [vmem:[%s3 + $0x1c] sm:$0xf]
  %v428 = vld [vmem:[%s3 + $0x20] sm:$0xf]
  %v429 = vld [vmem:[%s3 + $0x24] sm:$0xf]
  %v430 = vld [vmem:[%s3 + $0x28] sm:$0xf]
  %v431 = vld [vmem:[%s3 + $0x2c] sm:$0xf]
  %v432 = vld [vmem:[%s3 + $0x30] sm:$0xf]
  %v433 = vld [vmem:[%s3 + $0x34] sm:$0xf]
  %v434 = vld [vmem:[%s3 + $0x38] sm:$0xf]
  %v435 = vld [vmem:[%s3 + $0x3c] sm:$0xf]
  %v436 = vld [vmem:[%s3 + $0x40] sm:$0xf]
  %v437 = vld [vmem:[%s3 + $0x44] sm:$0xf]
  %v438 = vld [vmem:[%s3 + $0x48] sm:$0xf]
  %v439 = vld [vmem:[%s3 + $0x4c] sm:$0xf]
  %v440 = vld [vmem:[%s3 + $0x50] sm:$0xf]
  %v441 = vld [vmem:[%s3 + $0x54] sm:$0xf]
  %v442 = vld [vmem:[%s3 + $0x58] sm:$0xf]
  %v443 = vld [vmem:[%s3 + $0x5c] sm:$0xf]
  %v444 = vld [vmem:[%s3 + $0x60] sm:$0xf]
  %v445 = vld [vmem:[%s3 + $0x64] sm:$0xf]
  %v446 = vld [vmem:[%s3 + $0x68] sm:$0xf]
  %v447 = vld [vmem:[%s3 + $0x6c] sm:$0xf]
  %v448 = vld [vmem:[%s3 + $0x70] sm:$0xf]
  %v449 = vld [vmem:[%s3 + $0x74] sm:$0xf]
  %v450 = vld [vmem:[%s3 + $0x78] sm:$0xf]
  %v451 = vld [vmem:[%s3 + $0x7c] sm:$0xf]
  %v452 = vld [vmem:[%s3 + $0x80] sm:$0xf]
  %v453 = vld [vmem:[%s3 + $0x84] sm:$0xf]
  %v454 = vld [vmem:[%s3 + $0x88] sm:$0xf]
  %v455 = vld [vmem:[%s3 + $0x8c] sm:$0xf]
  %v456 = vld [vmem:[%s3 + $0x90] sm:$0xf]
  %v457 = vld [vmem:[%s3 + $0x94] sm:$0xf]
  %v458 = vld [vmem:[%s3 + $0x98] sm:$0xf]
  %v459 = vld [vmem:[%s3 + $0x9c] sm:$0xf]
  %v460 = vld [vmem:[%s3 + $0xa0] sm:$0xf]
  %v461 = vld [vmem:[%s3 + $0xa4] sm:$0xf]
  %v462 = vld [vmem:[%s3 + $0xa8] sm:$0xf]
  %v463 = vld [vmem:[%s3 + $0xac] sm:$0xf]
  %v464 = vld [vmem:[%s3 + $0xb0] sm:$0xf]
  %v465 = vld [vmem:[%s3 + $0xb4] sm:$0xf]
  %v466 = vld [vmem:[%s3 + $0xb8] sm:$0xf]
  %v467 = vld [vmem:[%s3 + $0xbc] sm:$0xf]
  %v516 = vunpack.c.l.b16 %v420
  %v517 = vunpack.c.l.b16 %v421
  %v518 = vunpack.c.l.b16 %v422
  %v519 = vunpack.c.l.b16 %v423
  %v520 = vunpack.c.l.b16 %v424
  %v521 = vunpack.c.l.b16 %v425
  %v522 = vunpack.c.l.b16 %v426
  %v523 = vunpack.c.l.b16 %v427
  %v524 = vunpack.c.l.b16 %v428
  %v525 = vunpack.c.l.b16 %v429
  %v526 = vunpack.c.l.b16 %v430
  %v527 = vunpack.c.l.b16 %v431
  %v528 = vunpack.c.l.b16 %v432
  %v529 = vunpack.c.l.b16 %v433
  %v530 = vunpack.c.l.b16 %v434
  %v531 = vunpack.c.l.b16 %v435
  %v532 = vunpack.c.l.b16 %v436
  %v533 = vunpack.c.l.b16 %v437
  %v534 = vunpack.c.l.b16 %v438
  %v535 = vunpack.c.l.b16 %v439
  %v536 = vunpack.c.l.b16 %v440
  %v537 = vunpack.c.l.b16 %v441
  %v538 = vunpack.c.l.b16 %v442
  %v539 = vunpack.c.l.b16 %v443
  %v540 = vunpack.c.l.b16 %v444
  %v541 = vunpack.c.l.b16 %v445
  %v542 = vunpack.c.l.b16 %v446
  %v543 = vunpack.c.l.b16 %v447
  %v544 = vunpack.c.l.b16 %v448
  %v545 = vunpack.c.l.b16 %v449
  %v546 = vunpack.c.l.b16 %v450
  %v547 = vunpack.c.l.b16 %v451
  %v548 = vunpack.c.l.b16 %v452
  %v549 = vunpack.c.l.b16 %v453
  %v550 = vunpack.c.l.b16 %v454
  %v551 = vunpack.c.l.b16 %v455
  %v552 = vunpack.c.l.b16 %v456
  %v553 = vunpack.c.l.b16 %v457
  %v554 = vunpack.c.l.b16 %v458
  %v555 = vunpack.c.l.b16 %v459
  %v556 = vunpack.c.l.b16 %v460
  %v557 = vunpack.c.l.b16 %v461
  %v558 = vunpack.c.l.b16 %v462
  %v559 = vunpack.c.l.b16 %v463
  %v560 = vunpack.c.l.b16 %v464
  %v561 = vunpack.c.l.b16 %v465
  %v562 = vunpack.c.l.b16 %v466
  %v563 = vunpack.c.l.b16 %v467
  %v564 = vpack.c.b16 %v517, %v516
  %v565 = vpack.c.b16 %v519, %v518
  %v566 = vpack.c.b16 %v521, %v520
  %v567 = vpack.c.b16 %v523, %v522
  %v568 = vpack.c.b16 %v525, %v524
  %v569 = vpack.c.b16 %v527, %v526
  %v570 = vpack.c.b16 %v529, %v528
  %v571 = vpack.c.b16 %v531, %v530
  %v572 = vpack.c.b16 %v533, %v532
  %v573 = vpack.c.b16 %v535, %v534
  %v574 = vpack.c.b16 %v537, %v536
  %v575 = vpack.c.b16 %v539, %v538
  %v576 = vpack.c.b16 %v541, %v540
  %v577 = vpack.c.b16 %v543, %v542
  %v578 = vpack.c.b16 %v545, %v544
  %v579 = vpack.c.b16 %v547, %v546
  %v580 = vpack.c.b16 %v549, %v548
  %v581 = vpack.c.b16 %v551, %v550
  %v582 = vpack.c.b16 %v553, %v552
  %v583 = vpack.c.b16 %v555, %v554
  %v584 = vpack.c.b16 %v557, %v556
  %v585 = vpack.c.b16 %v559, %v558
  %v586 = vpack.c.b16 %v561, %v560
  %v587 = vpack.c.b16 %v563, %v562
  %612 = vmatprep.subr.bf16.mxu0 0
  %613 = vmatpush1.bf16.msra.mxu0 %v564
  %614 = vmatprep.subr.bf16.mxu0 0
  %615 = vmatpush1.bf16.msra.mxu0 %v565
  %616 = vmatprep.subr.bf16.mxu0 0
  %617 = vmatpush1.bf16.msra.mxu0 %v566
  %618 = vmatprep.subr.bf16.mxu0 0
  %619 = vmatpush1.bf16.msra.mxu0 %v567
  %620 = vmatprep.subr.bf16.mxu0 0
  %621 = vmatpush1.bf16.msra.mxu0 %v568
  %622 = vmatprep.subr.bf16.mxu0 0
  %623 = vmatpush1.bf16.msra.mxu0 %v569
  %624 = vmatprep.subr.bf16.mxu0 0
  %625 = vmatpush1.bf16.msra.mxu0 %v570
  %626 = vmatprep.subr.bf16.mxu0 0
  %627 = vmatpush1.bf16.msra.mxu0 %v571
  %628 = vmatprep.subr.bf16.mxu0 0
  %629 = vmatpush1.bf16.msra.mxu0 %v572
  %630 = vmatprep.subr.bf16.mxu0 0
  %631 = vmatpush1.bf16.msra.mxu0 %v573
  %632 = vmatprep.subr.bf16.mxu0 0
  %633 = vmatpush1.bf16.msra.mxu0 %v574
  %634 = vmatprep.subr.bf16.mxu0 0
  %635 = vmatpush1.bf16.msra.mxu0 %v575
  %636 = vmatprep.subr.bf16.mxu0 0
  %637 = vmatpush1.bf16.msra.mxu0 %v576
  %638 = vmatprep.subr.bf16.mxu0 0
  %639 = vmatpush1.bf16.msra.mxu0 %v577
  %640 = vmatprep.subr.bf16.mxu0 0
  %641 = vmatpush1.bf16.msra.mxu0 %v578
  %642 = vmatprep.subr.bf16.mxu0 0
  %643 = vmatpush1.bf16.msra.mxu0 %v579
  %644 = vmatprep.mubr.bf16.mxu0 %v415
  %645 = vmatmul.mubr.bf16.gmra.mrb[0].mxu0 %v414
  %v646 = vpop.f32.mrb[0].mxu0
  %v647 = vadd.f32 0.0, %v646
  %v648 = vpop.f32.mrb[0].mxu0
  %v649 = vpop.f32.mrb[0].mxu0
  %v650 = vadd.f32 0.0, %v649
  %v651 = vpop.f32.mrb[0].mxu0
  %652 = vmatprep.mubr.bf16.mxu0 %v418
  %653 = vmatmul.mubr.bf16.gmra.mrb[0].mxu0 %v417
  %v654 = vpop.f32.mrb[0].mxu0
  %v655 = vadd.f32 0.0, %v654
  %v656 = vpop.f32.mrb[0].mxu0
  %v657 = vpop.f32.mrb[0].mxu0
  %v658 = vadd.f32 0.0, %v657
  %v659 = vpop.f32.mrb[0].mxu0
  %660 = vdwg.mxu0
  %661 = vmatprep.subr.bf16.mxu0 0
  %662 = vmatpush1.bf16.msra.mxu0 %v580
  %663 = vmatprep.subr.bf16.mxu0 0
  %664 = vmatpush1.bf16.msra.mxu0 %v581
  %665 = vmatprep.subr.bf16.mxu0 0
  %666 = vmatpush1.bf16.msra.mxu0 %v582
  %667 = vmatprep.subr.bf16.mxu0 0
  %668 = vmatpush1.bf16.msra.mxu0 %v583
  %669 = vmatprep.subr.bf16.mxu0 0
  %670 = vmatpush1.bf16.msra.mxu0 %v584
  %671 = vmatprep.subr.bf16.mxu0 0
  %672 = vmatpush1.bf16.msra.mxu0 %v585
  %673 = vmatprep.subr.bf16.mxu0 0
  %674 = vmatpush1.bf16.msra.mxu0 %v586
  %675 = vmatprep.subr.bf16.mxu0 0
  %676 = vmatpush1.bf16.msra.mxu0 %v587
  %677 = vmatprep.subr.bf16.mxu0 0
  %678 = vmatpush1.bf16.msra.mxu0 0
  %679 = vmatprep.subr.bf16.mxu0 0
  %680 = vmatpush1.bf16.msra.mxu0 0
  %681 = vmatprep.subr.bf16.mxu0 0
  %682 = vmatpush1.bf16.msra.mxu0 0
  %683 = vmatprep.subr.bf16.mxu0 0
  %684 = vmatpush1.bf16.msra.mxu0 0
  %685 = vmatprep.subr.bf16.mxu0 0
  %686 = vmatpush1.bf16.msra.mxu0 0
  %687 = vmatprep.subr.bf16.mxu0 0
  %688 = vmatpush1.bf16.msra.mxu0 0
  %689 = vmatprep.subr.bf16.mxu0 0
  %690 = vmatpush1.bf16.msra.mxu0 0
  %691 = vmatprep.subr.bf16.mxu0 0
  %692 = vmatpush1.bf16.msra.mxu0 0
  %693 = vmatprep.mubr.bf16.mxu0 0
  %694 = vmatmul.mubr.bf16.gmra.mrb[0].mxu0 %v416
  %v695 = vpop.f32.mrb[0].mxu0
  %v696 = vadd.f32 %v647, %v695
  %v697 = vpop.f32.mrb[0].mxu0
  %v698 = vpop.f32.mrb[0].mxu0
  %v699 = vadd.f32 %v650, %v698
  %v700 = vpop.f32.mrb[0].mxu0
  %701 = vmatprep.mubr.bf16.mxu0 0
  %702 = vmatmul.mubr.bf16.gmra.mrb[0].mxu0 %v419
  %v703 = vpop.f32.mrb[0].mxu0
  %v704 = vadd.f32 %v655, %v703
  %v705 = vpop.f32.mrb[0].mxu0
  %v706 = vpop.f32.mrb[0].mxu0
  %v707 = vadd.f32 %v658, %v706
  %v708 = vpop.f32.mrb[0].mxu0
  %709 = vdwg.mxu0
  %v710 = vadd.f32 %v53, %v696
  %v711 = vadd.f32 %v54, %v699
  %v712 = vadd.f32 %v55, %v704
  %v713 = vadd.f32 %v56, %v707
  %v714 = vld [vmem:[%s4] sm:$0x1]
  %v716 = vlaneseq
  %v717 = vshrl.u32 %v716, 7
  %v718 = vsub.s32 0, %v717
  %v719 = vrot.slane %v714, %v718
  %v721 = vadd.f32 %v710, %v719
  %v722 = vadd.f32 %v711, %v719
  %v723 = vadd.f32 %v712, %v719
  %v724 = vadd.f32 %v713, %v719
  %v725 = vmax.f32 %v721, 0.0
  %v726 = vmax.f32 %v722, 0.0
  %v727 = vmax.f32 %v723, 0.0
  %v728 = vmax.f32 %v724, 0.0
  %v729 = vrot.slane %v725, 7
  %v730 = vrot.slane %v726, 7
  %v731 = vrot.slane %v727, 7
  %v732 = vrot.slane %v728, 7
  %v733 = vsel %vm61, %v731, %v732
  %v734 = vsel %vm61, %v730, %v731
  %v735 = vsel %vm61, %v729, %v730
  %v736 = vsel %vm61, %v732, %v729
  %v737 = vsel %vm37, 0.0, %v736
  %v738 = vsel %vm38, 0.0, %v735
  %v739 = vsel %vm39, 0.0, %v734
  %v740 = vsel %vm40, 0.0, %v733
  %v741 = vrot.slane %v725, 1
  %v742 = vrot.slane %v726, 1
  %v743 = vrot.slane %v727, 1
  %v744 = vrot.slane %v728, 1
  %v745 = vsel %vm74, %v743, %v744
  %v746 = vsel %vm74, %v742, %v743
  %v747 = vsel %vm74, %v741, %v742
  %v748 = vsel %vm74, %v744, %v741
  %v749 = vsel %vm49, 0.0, %v747
  %v750 = vsel %vm50, 0.0, %v746
  %v751 = vsel %vm51, 0.0, %v745
  %v752 = vsel %vm52, 0.0, %v748
  %v753 = vpack.c.bf16 %v738, %v737
  %v754 = vpack.c.bf16 %v726, %v725
  %v755 = vpack.c.bf16 %v750, %v749
  %v756 = vpack.c.bf16 %v740, %v739
  %v757 = vpack.c.bf16 %v728, %v727
  %v758 = vpack.c.bf16 %v752, %v751
  %s759 = scalar_lea.vmem %s1, 192
  %v760 = vld [vmem:[%s759] sm:$0xf]
  %v761 = vld [vmem:[%s759 + $0x4] sm:$0xf]
  %v762 = vld [vmem:[%s759 + $0x8] sm:$0xf]
  %v763 = vld [vmem:[%s759 + $0xc] sm:$0xf]
  %v764 = vld [vmem:[%s759 + $0x10] sm:$0xf]
  %v765 = vld [vmem:[%s759 + $0x14] sm:$0xf]
  %v766 = vld [vmem:[%s759 + $0x18] sm:$0xf]
  %v767 = vld [vmem:[%s759 + $0x1c] sm:$0xf]
  %v768 = vld [vmem:[%s759 + $0x20] sm:$0xf]
  %v769 = vld [vmem:[%s759 + $0x24] sm:$0xf]
  %v770 = vld [vmem:[%s759 + $0x28] sm:$0xf]
  %v771 = vld [vmem:[%s759 + $0x2c] sm:$0xf]
  %v772 = vld [vmem:[%s759 + $0x30] sm:$0xf]
  %v773 = vld [vmem:[%s759 + $0x34] sm:$0xf]
  %v774 = vld [vmem:[%s759 + $0x38] sm:$0xf]
  %v775 = vld [vmem:[%s759 + $0x3c] sm:$0xf]
  %v776 = vld [vmem:[%s759 + $0x40] sm:$0xf]
  %v777 = vld [vmem:[%s759 + $0x44] sm:$0xf]
  %v778 = vld [vmem:[%s759 + $0x48] sm:$0xf]
  %v779 = vld [vmem:[%s759 + $0x4c] sm:$0xf]
  %v780 = vld [vmem:[%s759 + $0x50] sm:$0xf]
  %v781 = vld [vmem:[%s759 + $0x54] sm:$0xf]
  %v782 = vld [vmem:[%s759 + $0x58] sm:$0xf]
  %v783 = vld [vmem:[%s759 + $0x5c] sm:$0xf]
  %v784 = vld [vmem:[%s759 + $0x60] sm:$0xf]
  %v785 = vld [vmem:[%s759 + $0x64] sm:$0xf]
  %v786 = vld [vmem:[%s759 + $0x68] sm:$0xf]
  %v787 = vld [vmem:[%s759 + $0x6c] sm:$0xf]
  %v788 = vld [vmem:[%s759 + $0x70] sm:$0xf]
  %v789 = vld [vmem:[%s759 + $0x74] sm:$0xf]
  %v790 = vld [vmem:[%s759 + $0x78] sm:$0xf]
  %v791 = vld [vmem:[%s759 + $0x7c] sm:$0xf]
  %v792 = vld [vmem:[%s759 + $0x80] sm:$0xf]
  %v793 = vld [vmem:[%s759 + $0x84] sm:$0xf]
  %v794 = vld [vmem:[%s759 + $0x88] sm:$0xf]
  %v795 = vld [vmem:[%s759 + $0x8c] sm:$0xf]
  %v796 = vld [vmem:[%s759 + $0x90] sm:$0xf]
  %v797 = vld [vmem:[%s759 + $0x94] sm:$0xf]
  %v798 = vld [vmem:[%s759 + $0x98] sm:$0xf]
  %v799 = vld [vmem:[%s759 + $0x9c] sm:$0xf]
  %v800 = vld [vmem:[%s759 + $0xa0] sm:$0xf]
  %v801 = vld [vmem:[%s759 + $0xa4] sm:$0xf]
  %v802 = vld [vmem:[%s759 + $0xa8] sm:$0xf]
  %v803 = vld [vmem:[%s759 + $0xac] sm:$0xf]
  %v804 = vld [vmem:[%s759 + $0xb0] sm:$0xf]
  %v805 = vld [vmem:[%s759 + $0xb4] sm:$0xf]
  %v806 = vld [vmem:[%s759 + $0xb8] sm:$0xf]
  %v807 = vld [vmem:[%s759 + $0xbc] sm:$0xf]
  %s808 = scalar_lea.vmem %s2, 1
  %v809 = vld [vmem:[%s808] sm:$0x1]
  %v811 = vlaneseq
  %v812 = vshrl.u32 %v811, 7
  %v813 = vsub.s32 0, %v812
  %v814 = vrot.slane %v809, %v813
  %v864 = vunpack.c.l.b16 %v760
  %v865 = vunpack.c.l.b16 %v761
  %v866 = vunpack.c.l.b16 %v762
  %v867 = vunpack.c.l.b16 %v763
  %v868 = vunpack.c.l.b16 %v764
  %v869 = vunpack.c.l.b16 %v765
  %v870 = vunpack.c.l.b16 %v766
  %v871 = vunpack.c.l.b16 %v767
  %v872 = vunpack.c.l.b16 %v768
  %v873 = vunpack.c.l.b16 %v769
  %v874 = vunpack.c.l.b16 %v770
  %v875 = vunpack.c.l.b16 %v771
  %v876 = vunpack.c.l.b16 %v772
  %v877 = vunpack.c.l.b16 %v773
  %v878 = vunpack.c.l.b16 %v774
  %v879 = vunpack.c.l.b16 %v775
  %v880 = vunpack.c.l.b16 %v776
  %v881 = vunpack.c.l.b16 %v777
  %v882 = vunpack.c.l.b16 %v778
  %v883 = vunpack.c.l.b16 %v779
  %v884 = vunpack.c.l.b16 %v780
  %v885 = vunpack.c.l.b16 %v781
  %v886 = vunpack.c.l.b16 %v782
  %v887 = vunpack.c.l.b16 %v783
  %v888 = vunpack.c.l.b16 %v784
  %v889 = vunpack.c.l.b16 %v785
  %v890 = vunpack.c.l.b16 %v786
  %v891 = vunpack.c.l.b16 %v787
  %v892 = vunpack.c.l.b16 %v788
  %v893 = vunpack.c.l.b16 %v789
  %v894 = vunpack.c.l.b16 %v790
  %v895 = vunpack.c.l.b16 %v791
  %v896 = vunpack.c.l.b16 %v792
  %v897 = vunpack.c.l.b16 %v793
  %v898 = vunpack.c.l.b16 %v794
  %v899 = vunpack.c.l.b16 %v795
  %v900 = vunpack.c.l.b16 %v796
  %v901 = vunpack.c.l.b16 %v797
  %v902 = vunpack.c.l.b16 %v798
  %v903 = vunpack.c.l.b16 %v799
  %v904 = vunpack.c.l.b16 %v800
  %v905 = vunpack.c.l.b16 %v801
  %v906 = vunpack.c.l.b16 %v802
  %v907 = vunpack.c.l.b16 %v803
  %v908 = vunpack.c.l.b16 %v804
  %v909 = vunpack.c.l.b16 %v805
  %v910 = vunpack.c.l.b16 %v806
  %v911 = vunpack.c.l.b16 %v807
  %v912 = vpack.c.b16 %v865, %v864
  %v913 = vpack.c.b16 %v867, %v866
  %v914 = vpack.c.b16 %v869, %v868
  %v915 = vpack.c.b16 %v871, %v870
  %v916 = vpack.c.b16 %v873, %v872
  %v917 = vpack.c.b16 %v875, %v874
  %v918 = vpack.c.b16 %v877, %v876
  %v919 = vpack.c.b16 %v879, %v878
  %v920 = vpack.c.b16 %v881, %v880
  %v921 = vpack.c.b16 %v883, %v882
  %v922 = vpack.c.b16 %v885, %v884
  %v923 = vpack.c.b16 %v887, %v886
  %v924 = vpack.c.b16 %v889, %v888
  %v925 = vpack.c.b16 %v891, %v890
  %v926 = vpack.c.b16 %v893, %v892
  %v927 = vpack.c.b16 %v895, %v894
  %v928 = vpack.c.b16 %v897, %v896
  %v929 = vpack.c.b16 %v899, %v898
  %v930 = vpack.c.b16 %v901, %v900
  %v931 = vpack.c.b16 %v903, %v902
  %v932 = vpack.c.b16 %v905, %v904
  %v933 = vpack.c.b16 %v907, %v906
  %v934 = vpack.c.b16 %v909, %v908
  %v935 = vpack.c.b16 %v911, %v910
  %960 = vmatprep.subr.bf16.mxu0 0
  %961 = vmatpush1.bf16.msra.mxu0 %v912
  %962 = vmatprep.subr.bf16.mxu0 0
  %963 = vmatpush1.bf16.msra.mxu0 %v913
  %964 = vmatprep.subr.bf16.mxu0 0
  %965 = vmatpush1.bf16.msra.mxu0 %v914
  %966 = vmatprep.subr.bf16.mxu0 0
  %967 = vmatpush1.bf16.msra.mxu0 %v915
  %968 = vmatprep.subr.bf16.mxu0 0
  %969 = vmatpush1.bf16.msra.mxu0 %v916
  %970 = vmatprep.subr.bf16.mxu0 0
  %971 = vmatpush1.bf16.msra.mxu0 %v917
  %972 = vmatprep.subr.bf16.mxu0 0
  %973 = vmatpush1.bf16.msra.mxu0 %v918
  %974 = vmatprep.subr.bf16.mxu0 0
  %975 = vmatpush1.bf16.msra.mxu0 %v919
  %976 = vmatprep.subr.bf16.mxu0 0
  %977 = vmatpush1.bf16.msra.mxu0 %v920
  %978 = vmatprep.subr.bf16.mxu0 0
  %979 = vmatpush1.bf16.msra.mxu0 %v921
  %980 = vmatprep.subr.bf16.mxu0 0
  %981 = vmatpush1.bf16.msra.mxu0 %v922
  %982 = vmatprep.subr.bf16.mxu0 0
  %983 = vmatpush1.bf16.msra.mxu0 %v923
  %984 = vmatprep.subr.bf16.mxu0 0
  %985 = vmatpush1.bf16.msra.mxu0 %v924
  %986 = vmatprep.subr.bf16.mxu0 0
  %987 = vmatpush1.bf16.msra.mxu0 %v925
  %988 = vmatprep.subr.bf16.mxu0 0
  %989 = vmatpush1.bf16.msra.mxu0 %v926
  %990 = vmatprep.subr.bf16.mxu0 0
  %991 = vmatpush1.bf16.msra.mxu0 %v927
  %992 = vmatprep.mubr.bf16.mxu0 %v754
  %993 = vmatmul.mubr.bf16.gmra.mrb[0].mxu0 %v753
  %v994 = vpop.f32.mrb[0].mxu0
  %v995 = vadd.f32 %v814, %v994
  %v996 = vpop.f32.mrb[0].mxu0
  %v997 = vpop.f32.mrb[0].mxu0
  %v998 = vadd.f32 %v814, %v997
  %v999 = vpop.f32.mrb[0].mxu0
  %1000 = vmatprep.mubr.bf16.mxu0 %v757
  %1001 = vmatmul.mubr.bf16.gmra.mrb[0].mxu0 %v756
  %v1002 = vpop.f32.mrb[0].mxu0
  %v1003 = vadd.f32 %v814, %v1002
  %v1004 = vpop.f32.mrb[0].mxu0
  %v1005 = vpop.f32.mrb[0].mxu0
  %v1006 = vadd.f32 %v814, %v1005
  %v1007 = vpop.f32.mrb[0].mxu0
  %1008 = vdwg.mxu0
  %1009 = vmatprep.subr.bf16.mxu0 0
  %1010 = vmatpush1.bf16.msra.mxu0 %v928
  %1011 = vmatprep.subr.bf16.mxu0 0
  %1012 = vmatpush1.bf16.msra.mxu0 %v929
  %1013 = vmatprep.subr.bf16.mxu0 0
  %1014 = vmatpush1.bf16.msra.mxu0 %v930
  %1015 = vmatprep.subr.bf16.mxu0 0
  %1016 = vmatpush1.bf16.msra.mxu0 %v931
  %1017 = vmatprep.subr.bf16.mxu0 0
  %1018 = vmatpush1.bf16.msra.mxu0 %v932
  %1019 = vmatprep.subr.bf16.mxu0 0
  %1020 = vmatpush1.bf16.msra.mxu0 %v933
  %1021 = vmatprep.subr.bf16.mxu0 0
  %1022 = vmatpush1.bf16.msra.mxu0 %v934
  %1023 = vmatprep.subr.bf16.mxu0 0
  %1024 = vmatpush1.bf16.msra.mxu0 %v935
  %1025 = vmatprep.subr.bf16.mxu0 0
  %1026 = vmatpush1.bf16.msra.mxu0 0
  %1027 = vmatprep.subr.bf16.mxu0 0
  %1028 = vmatpush1.bf16.msra.mxu0 0
  %1029 = vmatprep.subr.bf16.mxu0 0
  %1030 = vmatpush1.bf16.msra.mxu0 0
  %1031 = vmatprep.subr.bf16.mxu0 0
  %1032 = vmatpush1.bf16.msra.mxu0 0
  %1033 = vmatprep.subr.bf16.mxu0 0
  %1034 = vmatpush1.bf16.msra.mxu0 0
  %1035 = vmatprep.subr.bf16.mxu0 0
  %1036 = vmatpush1.bf16.msra.mxu0 0
  %1037 = vmatprep.subr.bf16.mxu0 0
  %1038 = vmatpush1.bf16.msra.mxu0 0
  %1039 = vmatprep.subr.bf16.mxu0 0
  %1040 = vmatpush1.bf16.msra.mxu0 0
  %1041 = vmatprep.mubr.bf16.mxu0 0
  %1042 = vmatmul.mubr.bf16.gmra.mrb[0].mxu0 %v755
  %v1043 = vpop.f32.mrb[0].mxu0
  %v1044 = vadd.f32 %v995, %v1043
  %v1045 = vpop.f32.mrb[0].mxu0
  %v1046 = vpop.f32.mrb[0].mxu0
  %v1047 = vadd.f32 %v998, %v1046
  %v1048 = vpop.f32.mrb[0].mxu0
  %1049 = vmatprep.mubr.bf16.mxu0 0
  %1050 = vmatmul.mubr.bf16.gmra.mrb[0].mxu0 %v758
  %v1051 = vpop.f32.mrb[0].mxu0
  %v1052 = vadd.f32 %v1003, %v1051
  %v1053 = vpop.f32.mrb[0].mxu0
  %v1054 = vpop.f32.mrb[0].mxu0
  %v1055 = vadd.f32 %v1006, %v1054
  %v1056 = vpop.f32.mrb[0].mxu0
  %1057 = vdwg.mxu0
  %v1058 = vmax.f32 %v1044, 0.0
  %v1059 = vmax.f32 %v1047, 0.0
  %v1060 = vmax.f32 %v1052, 0.0
  %v1061 = vmax.f32 %v1055, 0.0
  %v1062 = vrot.slane %v1058, 7
  %v1063 = vrot.slane %v1059, 7
  %v1064 = vrot.slane %v1060, 7
  %v1065 = vrot.slane %v1061, 7
  %v1066 = vsel %vm61, %v1064, %v1065
  %v1067 = vsel %vm61, %v1063, %v1064
  %v1068 = vsel %vm61, %v1062, %v1063
  %v1069 = vsel %vm61, %v1065, %v1062
  %v1070 = vsel %vm37, 0.0, %v1069
  %v1071 = vsel %vm38, 0.0, %v1068
  %v1072 = vsel %vm39, 0.0, %v1067
  %v1073 = vsel %vm40, 0.0, %v1066
  %v1074 = vrot.slane %v1058, 1
  %v1075 = vrot.slane %v1059, 1
  %v1076 = vrot.slane %v1060, 1
  %v1077 = vrot.slane %v1061, 1
  %v1078 = vsel %vm74, %v1076, %v1077
  %v1079 = vsel %vm74, %v1075, %v1076
  %v1080 = vsel %vm74, %v1074, %v1075
  %v1081 = vsel %vm74, %v1077, %v1074
  %v1082 = vsel %vm49, 0.0, %v1080
  %v1083 = vsel %vm50, 0.0, %v1079
  %v1084 = vsel %vm51, 0.0, %v1078
  %v1085 = vsel %vm52, 0.0, %v1081
  %v1086 = vpack.c.bf16 %v1071, %v1070
  %v1087 = vpack.c.bf16 %v1059, %v1058
  %v1088 = vpack.c.bf16 %v1083, %v1082
  %v1089 = vpack.c.bf16 %v1073, %v1072
  %v1090 = vpack.c.bf16 %v1061, %v1060
  %v1091 = vpack.c.bf16 %v1085, %v1084
  %s1092 = scalar_lea.vmem %s3, 192
  %v1093 = vld [vmem:[%s1092] sm:$0xf]
  %v1094 = vld [vmem:[%s1092 + $0x4] sm:$0xf]
  %v1095 = vld [vmem:[%s1092 + $0x8] sm:$0xf]
  %v1096 = vld [vmem:[%s1092 + $0xc] sm:$0xf]
  %v1097 = vld [vmem:[%s1092 + $0x10] sm:$0xf]
  %v1098 = vld [vmem:[%s1092 + $0x14] sm:$0xf]
  %v1099 = vld [vmem:[%s1092 + $0x18] sm:$0xf]
  %v1100 = vld [vmem:[%s1092 + $0x1c] sm:$0xf]
  %v1101 = vld [vmem:[%s1092 + $0x20] sm:$0xf]
  %v1102 = vld [vmem:[%s1092 + $0x24] sm:$0xf]
  %v1103 = vld [vmem:[%s1092 + $0x28] sm:$0xf]
  %v1104 = vld [vmem:[%s1092 + $0x2c] sm:$0xf]
  %v1105 = vld [vmem:[%s1092 + $0x30] sm:$0xf]
  %v1106 = vld [vmem:[%s1092 + $0x34] sm:$0xf]
  %v1107 = vld [vmem:[%s1092 + $0x38] sm:$0xf]
  %v1108 = vld [vmem:[%s1092 + $0x3c] sm:$0xf]
  %v1109 = vld [vmem:[%s1092 + $0x40] sm:$0xf]
  %v1110 = vld [vmem:[%s1092 + $0x44] sm:$0xf]
  %v1111 = vld [vmem:[%s1092 + $0x48] sm:$0xf]
  %v1112 = vld [vmem:[%s1092 + $0x4c] sm:$0xf]
  %v1113 = vld [vmem:[%s1092 + $0x50] sm:$0xf]
  %v1114 = vld [vmem:[%s1092 + $0x54] sm:$0xf]
  %v1115 = vld [vmem:[%s1092 + $0x58] sm:$0xf]
  %v1116 = vld [vmem:[%s1092 + $0x5c] sm:$0xf]
  %v1117 = vld [vmem:[%s1092 + $0x60] sm:$0xf]
  %v1118 = vld [vmem:[%s1092 + $0x64] sm:$0xf]
  %v1119 = vld [vmem:[%s1092 + $0x68] sm:$0xf]
  %v1120 = vld [vmem:[%s1092 + $0x6c] sm:$0xf]
  %v1121 = vld [vmem:[%s1092 + $0x70] sm:$0xf]
  %v1122 = vld [vmem:[%s1092 + $0x74] sm:$0xf]
  %v1123 = vld [vmem:[%s1092 + $0x78] sm:$0xf]
  %v1124 = vld [vmem:[%s1092 + $0x7c] sm:$0xf]
  %v1125 = vld [vmem:[%s1092 + $0x80] sm:$0xf]
  %v1126 = vld [vmem:[%s1092 + $0x84] sm:$0xf]
  %v1127 = vld [vmem:[%s1092 + $0x88] sm:$0xf]
  %v1128 = vld [vmem:[%s1092 + $0x8c] sm:$0xf]
  %v1129 = vld [vmem:[%s1092 + $0x90] sm:$0xf]
  %v1130 = vld [vmem:[%s1092 + $0x94] sm:$0xf]
  %v1131 = vld [vmem:[%s1092 + $0x98] sm:$0xf]
  %v1132 = vld [vmem:[%s1092 + $0x9c] sm:$0xf]
  %v1133 = vld [vmem:[%s1092 + $0xa0] sm:$0xf]
  %v1134 = vld [vmem:[%s1092 + $0xa4] sm:$0xf]
  %v1135 = vld [vmem:[%s1092 + $0xa8] sm:$0xf]
  %v1136 = vld [vmem:[%s1092 + $0xac] sm:$0xf]
  %v1137 = vld [vmem:[%s1092 + $0xb0] sm:$0xf]
  %v1138 = vld [vmem:[%s1092 + $0xb4] sm:$0xf]
  %v1139 = vld [vmem:[%s1092 + $0xb8] sm:$0xf]
  %v1140 = vld [vmem:[%s1092 + $0xbc] sm:$0xf]
  %v1189 = vunpack.c.l.b16 %v1093
  %v1190 = vunpack.c.l.b16 %v1094
  %v1191 = vunpack.c.l.b16 %v1095
  %v1192 = vunpack.c.l.b16 %v1096
  %v1193 = vunpack.c.l.b16 %v1097
  %v1194 = vunpack.c.l.b16 %v1098
  %v1195 = vunpack.c.l.b16 %v1099
  %v1196 = vunpack.c.l.b16 %v1100
  %v1197 = vunpack.c.l.b16 %v1101
  %v1198 = vunpack.c.l.b16 %v1102
  %v1199 = vunpack.c.l.b16 %v1103
  %v1200 = vunpack.c.l.b16 %v1104
  %v1201 = vunpack.c.l.b16 %v1105
  %v1202 = vunpack.c.l.b16 %v1106
  %v1203 = vunpack.c.l.b16 %v1107
  %v1204 = vunpack.c.l.b16 %v1108
  %v1205 = vunpack.c.l.b16 %v1109
  %v1206 = vunpack.c.l.b16 %v1110
  %v1207 = vunpack.c.l.b16 %v1111
  %v1208 = vunpack.c.l.b16 %v1112
  %v1209 = vunpack.c.l.b16 %v1113
  %v1210 = vunpack.c.l.b16 %v1114
  %v1211 = vunpack.c.l.b16 %v1115
  %v1212 = vunpack.c.l.b16 %v1116
  %v1213 = vunpack.c.l.b16 %v1117
  %v1214 = vunpack.c.l.b16 %v1118
  %v1215 = vunpack.c.l.b16 %v1119
  %v1216 = vunpack.c.l.b16 %v1120
  %v1217 = vunpack.c.l.b16 %v1121
  %v1218 = vunpack.c.l.b16 %v1122
  %v1219 = vunpack.c.l.b16 %v1123
  %v1220 = vunpack.c.l.b16 %v1124
  %v1221 = vunpack.c.l.b16 %v1125
  %v1222 = vunpack.c.l.b16 %v1126
  %v1223 = vunpack.c.l.b16 %v1127
  %v1224 = vunpack.c.l.b16 %v1128
  %v1225 = vunpack.c.l.b16 %v1129
  %v1226 = vunpack.c.l.b16 %v1130
  %v1227 = vunpack.c.l.b16 %v1131
  %v1228 = vunpack.c.l.b16 %v1132
  %v1229 = vunpack.c.l.b16 %v1133
  %v1230 = vunpack.c.l.b16 %v1134
  %v1231 = vunpack.c.l.b16 %v1135
  %v1232 = vunpack.c.l.b16 %v1136
  %v1233 = vunpack.c.l.b16 %v1137
  %v1234 = vunpack.c.l.b16 %v1138
  %v1235 = vunpack.c.l.b16 %v1139
  %v1236 = vunpack.c.l.b16 %v1140
  %v1237 = vpack.c.b16 %v1190, %v1189
  %v1238 = vpack.c.b16 %v1192, %v1191
  %v1239 = vpack.c.b16 %v1194, %v1193
  %v1240 = vpack.c.b16 %v1196, %v1195
  %v1241 = vpack.c.b16 %v1198, %v1197
  %v1242 = vpack.c.b16 %v1200, %v1199
  %v1243 = vpack.c.b16 %v1202, %v1201
  %v1244 = vpack.c.b16 %v1204, %v1203
  %v1245 = vpack.c.b16 %v1206, %v1205
  %v1246 = vpack.c.b16 %v1208, %v1207
  %v1247 = vpack.c.b16 %v1210, %v1209
  %v1248 = vpack.c.b16 %v1212, %v1211
  %v1249 = vpack.c.b16 %v1214, %v1213
  %v1250 = vpack.c.b16 %v1216, %v1215
  %v1251 = vpack.c.b16 %v1218, %v1217
  %v1252 = vpack.c.b16 %v1220, %v1219
  %v1253 = vpack.c.b16 %v1222, %v1221
  %v1254 = vpack.c.b16 %v1224, %v1223
  %v1255 = vpack.c.b16 %v1226, %v1225
  %v1256 = vpack.c.b16 %v1228, %v1227
  %v1257 = vpack.c.b16 %v1230, %v1229
  %v1258 = vpack.c.b16 %v1232, %v1231
  %v1259 = vpack.c.b16 %v1234, %v1233
  %v1260 = vpack.c.b16 %v1236, %v1235
  %1285 = vmatprep.subr.bf16.mxu0 0
  %1286 = vmatpush1.bf16.msra.mxu0 %v1237
  %1287 = vmatprep.subr.bf16.mxu0 0
  %1288 = vmatpush1.bf16.msra.mxu0 %v1238
  %1289 = vmatprep.subr.bf16.mxu0 0
  %1290 = vmatpush1.bf16.msra.mxu0 %v1239
  %1291 = vmatprep.subr.bf16.mxu0 0
  %1292 = vmatpush1.bf16.msra.mxu0 %v1240
  %1293 = vmatprep.subr.bf16.mxu0 0
  %1294 = vmatpush1.bf16.msra.mxu0 %v1241
  %1295 = vmatprep.subr.bf16.mxu0 0
  %1296 = vmatpush1.bf16.msra.mxu0 %v1242
  %1297 = vmatprep.subr.bf16.mxu0 0
  %1298 = vmatpush1.bf16.msra.mxu0 %v1243
  %1299 = vmatprep.subr.bf16.mxu0 0
  %1300 = vmatpush1.bf16.msra.mxu0 %v1244
  %1301 = vmatprep.subr.bf16.mxu0 0
  %1302 = vmatpush1.bf16.msra.mxu0 %v1245
  %1303 = vmatprep.subr.bf16.mxu0 0
  %1304 = vmatpush1.bf16.msra.mxu0 %v1246
  %1305 = vmatprep.subr.bf16.mxu0 0
  %1306 = vmatpush1.bf16.msra.mxu0 %v1247
  %1307 = vmatprep.subr.bf16.mxu0 0
  %1308 = vmatpush1.bf16.msra.mxu0 %v1248
  %1309 = vmatprep.subr.bf16.mxu0 0
  %1310 = vmatpush1.bf16.msra.mxu0 %v1249
  %1311 = vmatprep.subr.bf16.mxu0 0
  %1312 = vmatpush1.bf16.msra.mxu0 %v1250
  %1313 = vmatprep.subr.bf16.mxu0 0
  %1314 = vmatpush1.bf16.msra.mxu0 %v1251
  %1315 = vmatprep.subr.bf16.mxu0 0
  %1316 = vmatpush1.bf16.msra.mxu0 %v1252
  %1317 = vmatprep.mubr.bf16.mxu0 %v1087
  %1318 = vmatmul.mubr.bf16.gmra.mrb[0].mxu0 %v1086
  %v1319 = vpop.f32.mrb[0].mxu0
  %v1320 = vadd.f32 0.0, %v1319
  %v1321 = vpop.f32.mrb[0].mxu0
  %v1322 = vpop.f32.mrb[0].mxu0
  %v1323 = vadd.f32 0.0, %v1322
  %v1324 = vpop.f32.mrb[0].mxu0
  %1325 = vmatprep.mubr.bf16.mxu0 %v1090
  %1326 = vmatmul.mubr.bf16.gmra.mrb[0].mxu0 %v1089
  %v1327 = vpop.f32.mrb[0].mxu0
  %v1328 = vadd.f32 0.0, %v1327
  %v1329 = vpop.f32.mrb[0].mxu0
  %v1330 = vpop.f32.mrb[0].mxu0
  %v1331 = vadd.f32 0.0, %v1330
  %v1332 = vpop.f32.mrb[0].mxu0
  %1333 = vdwg.mxu0
  %1334 = vmatprep.subr.bf16.mxu0 0
  %1335 = vmatpush1.bf16.msra.mxu0 %v1253
  %1336 = vmatprep.subr.bf16.mxu0 0
  %1337 = vmatpush1.bf16.msra.mxu0 %v1254
  %1338 = vmatprep.subr.bf16.mxu0 0
  %1339 = vmatpush1.bf16.msra.mxu0 %v1255
  %1340 = vmatprep.subr.bf16.mxu0 0
  %1341 = vmatpush1.bf16.msra.mxu0 %v1256
  %1342 = vmatprep.subr.bf16.mxu0 0
  %1343 = vmatpush1.bf16.msra.mxu0 %v1257
  %1344 = vmatprep.subr.bf16.mxu0 0
  %1345 = vmatpush1.bf16.msra.mxu0 %v1258
  %1346 = vmatprep.subr.bf16.mxu0 0
  %1347 = vmatpush1.bf16.msra.mxu0 %v1259
  %1348 = vmatprep.subr.bf16.mxu0 0
  %1349 = vmatpush1.bf16.msra.mxu0 %v1260
  %1350 = vmatprep.subr.bf16.mxu0 0
  %1351 = vmatpush1.bf16.msra.mxu0 0
  %1352 = vmatprep.subr.bf16.mxu0 0
  %1353 = vmatpush1.bf16.msra.mxu0 0
  %1354 = vmatprep.subr.bf16.mxu0 0
  %1355 = vmatpush1.bf16.msra.mxu0 0
  %1356 = vmatprep.subr.bf16.mxu0 0
  %1357 = vmatpush1.bf16.msra.mxu0 0
  %1358 = vmatprep.subr.bf16.mxu0 0
  %1359 = vmatpush1.bf16.msra.mxu0 0
  %1360 = vmatprep.subr.bf16.mxu0 0
  %1361 = vmatpush1.bf16.msra.mxu0 0
  %1362 = vmatprep.subr.bf16.mxu0 0
  %1363 = vmatpush1.bf16.msra.mxu0 0
  %1364 = vmatprep.subr.bf16.mxu0 0
  %1365 = vmatpush1.bf16.msra.mxu0 0
  %1366 = vmatprep.mubr.bf16.mxu0 0
  %1367 = vmatmul.mubr.bf16.gmra.mrb[0].mxu0 %v1088
  %v1368 = vpop.f32.mrb[0].mxu0
  %v1369 = vadd.f32 %v1320, %v1368
  %v1370 = vpop.f32.mrb[0].mxu0
  %v1371 = vpop.f32.mrb[0].mxu0
  %v1372 = vadd.f32 %v1323, %v1371
  %v1373 = vpop.f32.mrb[0].mxu0
  %1374 = vmatprep.mubr.bf16.mxu0 0
  %1375 = vmatmul.mubr.bf16.gmra.mrb[0].mxu0 %v1091
  %v1376 = vpop.f32.mrb[0].mxu0
  %v1377 = vadd.f32 %v1328, %v1376
  %v1378 = vpop.f32.mrb[0].mxu0
  %v1379 = vpop.f32.mrb[0].mxu0
  %v1380 = vadd.f32 %v1331, %v1379
  %v1381 = vpop.f32.mrb[0].mxu0
  %1382 = vdwg.mxu0
  %v1383 = vadd.f32 %v725, %v1369
  %v1384 = vadd.f32 %v726, %v1372
  %v1385 = vadd.f32 %v727, %v1377
  %v1386 = vadd.f32 %v728, %v1380
  %s1387 = scalar_lea.vmem %s4, 1
  %v1388 = vld [vmem:[%s1387] sm:$0x1]
  %v1390 = vlaneseq
  %v1391 = vshrl.u32 %v1390, 7
  %v1392 = vsub.s32 0, %v1391
  %v1393 = vrot.slane %v1388, %v1392
  %v1395 = vadd.f32 %v1383, %v1393
  %v1396 = vadd.f32 %v1384, %v1393
  %v1397 = vadd.f32 %v1385, %v1393
  %v1398 = vadd.f32 %v1386, %v1393
  %v1399 = vmax.f32 %v1395, 0.0
  %v1400 = vmax.f32 %v1396, 0.0
  %v1401 = vmax.f32 %v1397, 0.0
  %v1402 = vmax.f32 %v1398, 0.0
  %v1403 = vld [vmem:[%s5] sm:$0x1]
  %v1405 = vlaneseq
  %v1406 = vshrl.u32 %v1405, 7
  %v1407 = vsub.s32 0, %v1406
  %v1408 = vrot.slane %v1403, %v1407
  %v1410 = vsub.f32 %v1399, %v1408
  %v1411 = vsub.f32 %v1400, %v1408
  %v1412 = vsub.f32 %v1401, %v1408
  %v1413 = vsub.f32 %v1402, %v1408
  %v1414 = vmax.f32 %v1410, 0.0
  %v1415 = vmax.f32 %v1411, 0.0
  %v1416 = vmax.f32 %v1412, 0.0
  %v1417 = vmax.f32 %v1413, 0.0
  %1418 = vst [vmem:[%s6] sm:$0xff] %v1414
  %1419 = vst [vmem:[%s6 + $0x8] sm:$0xff] %v1415
  %1420 = vst [vmem:[%s6 + $0x10] sm:$0xff] %v1416
  %1421 = vst [vmem:[%s6 + $0x18] sm:$0xff] %v1417
  // Predicated region
  $region26: #{mnet_forward.1} parent=0 // pred_check
    _
  $region27: #{mnet_forward.1} parent=0 // pred_check_branch
    %1423 = sbr.rel (0) target = $region29
  $region28: #{mnet_forward.1} parent=0 // pred_region
    _
  $region29: #{mnet_forward.1} parent=0 // pred_fallthru
    _
  // Predicated region
  $region30: #{mnet_forward.1} parent=0 // pred_check
    _
  $region31: #{mnet_forward.1} parent=0 // pred_check_branch
    %1425 = sbr.rel (0) target = $region33
  $region32: #{mnet_forward.1} parent=0 // pred_region
    _
  $region33: #{mnet_forward.1} parent=0 // pred_fallthru
    _

</llo_original>
